<compile_context>
chip_gen: v7x
topology: tpu7x:2x2x1
jax: 0.10.0
libtpu: 0.0.40
codegen_flags: <defaults>
</compile_context>

<pallas_src>
import functools

import jax
import jax.numpy as jnp
from jax import lax
from jax.experimental import pallas as pl
from jax.experimental.pallas import tpu as pltpu

BN_EPS = 1e-5


def _round_up(x, m):
    return -(-x // m) * m


def _per_buffer_target_bytes():
    """Per-pipelined-buffer byte target for the streamed x tile (double-buffered)."""
    try:
        kind = jax.devices()[0].device_kind.lower()
    except Exception:
        kind = ""
    if "v6" in kind or "v7" in kind:
        return 6 << 20   # 12 MiB double-buffered: well inside the 32 MiB default scoped VMEM
    return 4 << 20       # v5e (16 MiB default scoped VMEM) and unknown chips: stay conservative


def _gen_kernel(x_ref,
                w1_ref, b1_ref, w2_ref, b2_ref, w3_ref, b3_ref,
                wh_ref, bh_ref,
                out_ref,
                max_acc,
                *, n_points, tn):
    """Running max over the point axis; fused folded-BN MLP head on the last step."""
    j = pl.program_id(1)
    last = pl.num_programs(1) - 1

    @pl.when(j == 0)
    def _():
        max_acc[...] = jnp.full_like(max_acc, -jnp.inf)

    def fold(block):
        # Reduce in x's native dtype; upcast only the (tb, E) partial result.
        part = jnp.max(block, axis=1).astype(jnp.float32)
        max_acc[...] = jnp.maximum(max_acc[...], part)

    n_rem = n_points % tn            # static Python int
    if n_rem == 0:
        fold(x_ref[...])
    else:
        @pl.when(j != last)
        def _():
            fold(x_ref[...])

        @pl.when(j == last)
        def _():
            # Mask the ragged tail of the point axis (replaces host-side padding).
            idx = lax.broadcasted_iota(jnp.int32, x_ref.shape, 1)
            fold(jnp.where(idx < n_rem, x_ref[...], -jnp.inf))

    @pl.when(j == last)
    def _():
        def dense(h, w_ref, b_ref):
            return jnp.dot(h, w_ref[...],
                           preferred_element_type=jnp.float32) + b_ref[...]

        h = max_acc[...]
        h = jnp.maximum(dense(h, w1_ref, b1_ref), 0.0)   # Linear + BN(folded) + ReLU
        h = jnp.maximum(dense(h, w2_ref, b2_ref), 0.0)
        h = jnp.maximum(dense(h, w3_ref, b3_ref), 0.0)

        y = dense(h, wh_ref, bh_ref)                     # (tb, 8): [rot(4) | tra(3) | pad(1)]
        rot = y[:, :4]
        inv = lax.rsqrt(jnp.sum(rot * rot, axis=-1, keepdims=True))
        lane = lax.broadcasted_iota(jnp.int32, y.shape, 1)
        # Normalize only the rotation lanes; single (tb, 8) store.
        out_ref[...] = jnp.where(lane < 4, y * inv, y).astype(out_ref.dtype)


def generator_forward(x, params, *, tb=None, tn=None):
    """x: (B, N, emb_dims) -> (rotation (B, 4) unit-norm, translation (B, 3))."""
    B, N, E = x.shape
    (w1, b1), (w2, b2), (w3, b3), (wr, br), (wt, bt) = params
    assert w1.shape[0] == E
    c1, c2, c3 = w1.shape[1], w2.shape[1], w3.shape[1]

    # Fuse the two tiny projection heads into one (c3, 8) matmul: [rot | tra | 0-pad].
    wh = jnp.concatenate([wr, wt, jnp.zeros((c3, 1), wr.dtype)], axis=1)
    bh = jnp.concatenate([br, bt, jnp.zeros((1, 1), br.dtype)], axis=1)

    # --- tile selection -----------------------------------------------------
    if tb is None:
        # >=2 batch tiles whenever B > 8 so megacore can shard the 'parallel' axis.
        tb = B if B < 8 else 8
    assert tb == B or tb % 8 == 0, "tb must be a multiple of 8 (or equal to B)"
    if tn is None:
        target = _per_buffer_target_bytes()
        tn = max(8, (target // (tb * E * x.dtype.itemsize)) // 8 * 8)
    tn = min(tn, _round_up(N, 8))

    grid = (pl.cdiv(B, tb), pl.cdiv(N, tn))   # ragged B / N: no padding, partial blocks

    inv_spec = lambda i, j: (0, 0)            # grid-invariant weights / biases
    in_specs = [
        pl.BlockSpec((tb, tn, E), lambda i, j: (i, j, 0)),
        pl.BlockSpec(w1.shape, inv_spec), pl.BlockSpec(b1.shape, inv_spec),
        pl.BlockSpec(w2.shape, inv_spec), pl.BlockSpec(b2.shape, inv_spec),
        pl.BlockSpec(w3.shape, inv_spec), pl.BlockSpec(b3.shape, inv_spec),
        pl.BlockSpec(wh.shape, inv_spec), pl.BlockSpec(bh.shape, inv_spec),
    ]
    out_spec = pl.BlockSpec((tb, 8), lambda i, j: (i, 0))
    out_shape = jax.ShapeDtypeStruct((B, 8), jnp.float32)

    flops = 2 * B * (E * c1 + c1 * c2 + c2 * c3 + c3 * 8) + B * N * E
    bytes_accessed = (int(x.size) * x.dtype.itemsize
                      + sum(int(a.size) * a.dtype.itemsize
                            for a in (w1, b1, w2, b2, w3, b3, wh, bh))
                      + B * 8 * 4)

    kernel = functools.partial(_gen_kernel, n_points=N, tn=tn)

    out = pl.pallas_call(
        kernel,
        out_shape=out_shape,
        grid_spec=pltpu.PrefetchScalarGridSpec(
            num_scalar_prefetch=0,
            grid=grid,
            in_specs=in_specs,
            out_specs=out_spec,
            scratch_shapes=[pltpu.VMEM((tb, E), jnp.float32)],   # running max
        ),
        compiler_params=pltpu.CompilerParams(
            # batch tiles independent (megacore-shardable); point axis is the reduction
            dimension_semantics=("parallel", "arbitrary"),
            # NOTE: no vmem_limit_bytes override -> tiles sized to fit every
            # generation's default scoped-VMEM budget (v5e 16 MiB, v6e/v7x 32 MiB).
        ),
        cost_estimate=pl.CostEstimate(flops=int(flops),
                                      transcendentals=int(B),
                                      bytes_accessed=int(bytes_accessed)),
    )(x, w1, b1, w2, b2, w3, b3, wh, bh)

    return out[:, :4], out[:, 4:7]


# ----------------------------- parameter prep --------------------------------

def _fold_linear_bn(key, c_in, c_out):
    """Linear(c_in->c_out) + BatchNorm1d(c_out) eval-mode, folded to (W^T*scale, shift)."""
    kw, kb, kg, kbe, km, kv = jax.random.split(key, 6)
    bound = 1.0 / (c_in ** 0.5)
    w = jax.random.uniform(kw, (c_out, c_in), jnp.float32, -bound, bound)
    b = jax.random.uniform(kb, (c_out,), jnp.float32, -bound, bound)
    gamma = 1.0 + 0.1 * jax.random.normal(kg, (c_out,), jnp.float32)
    beta = 0.1 * jax.random.normal(kbe, (c_out,), jnp.float32)
    mean = 0.1 * jax.random.normal(km, (c_out,), jnp.float32)
    var = jnp.abs(1.0 + 0.1 * jax.random.normal(kv, (c_out,), jnp.float32))

    scale = gamma / jnp.sqrt(var + BN_EPS)
    w_folded_t = (w * scale[:, None]).T                 # (c_in, c_out), BN scale folded in
    shift = (b - mean) * scale + beta
    return w_folded_t.astype(jnp.float32), shift.reshape(1, c_out).astype(jnp.float32)


def _linear(key, c_in, c_out, bias_offset=0.0):
    kw, kb = jax.random.split(key)
    bound = 1.0 / (c_in ** 0.5)
    w = jax.random.uniform(kw, (c_out, c_in), jnp.float32, -bound, bound)
    b = bias_offset + jax.random.uniform(kb, (c_out,), jnp.float32, -bound, bound)
    return w.T.astype(jnp.float32), b.reshape(1, c_out).astype(jnp.float32)


def make_generator_params(key, emb_dims):
    c0, c1, c2, c3 = emb_dims, emb_dims // 2, emb_dims // 4, emb_dims // 8
    k1, k2, k3, kr, kt = jax.random.split(key, 5)
    return (
        _fold_linear_bn(k1, c0, c1),
        _fold_linear_bn(k2, c1, c2),
        _fold_linear_bn(k3, c2, c3),
        # bias offset keeps ||rot|| well away from 0 so the unit-normalization
        # comparison against the reference is well conditioned
        _linear(kr, c3, 4, bias_offset=0.5),
        _linear(kt, c3, 3),
    )


# ------------------------------- reference -----------------------------------

def _reference(x, params):
    (w1, b1), (w2, b2), (w3, b3), (wr, br), (wt, bt) = params
    h = jnp.max(x.astype(jnp.float32), axis=1)
    for w, b in ((w1, b1), (w2, b2), (w3, b3)):
        h = jnp.maximum(h @ w + b, 0.0)
    rot = h @ wr + br
    tra = h @ wt + bt
    rot = rot / jnp.linalg.norm(rot, axis=-1, keepdims=True)
    return rot, tra


if __name__ == "__main__":
    key = jax.random.PRNGKey(0)
    kx, kp = jax.random.split(key)

    # emb_dims=256 -> MLP 256 -> 128 -> 64 -> 32; B and N deliberately ragged.
    B, N, E = 10, 200, 256
    x = jax.random.normal(kx, (B, N, E), jnp.float32)
    params = make_generator_params(kp, E)

    rot_ref, tra_ref = _reference(x, params)

    # Default tiling: single reduction step (tn covers N), 2 batch tiles (8 + partial 2).
    rot, tra = generator_forward(x, params)
    # Forced small tn: multi-step reduction plus the in-kernel ragged-N tail mask.
    rot2, tra2 = generator_forward(x, params, tn=64)
    rot, tra, rot2, tra2 = jax.block_until_ready((rot, tra, rot2, tra2))

    assert rot.shape == (B, 4) and tra.shape == (B, 3)
    for r, t in ((rot, tra), (rot2, tra2)):
        assert jnp.allclose(r, rot_ref, atol=1e-2, rtol=1e-2), "rotation mismatch"
        assert jnp.allclose(t, tra_ref, atol=1e-2, rtol=1e-2), "translation mismatch"

    print("KERNEL_OK")
</pallas_src>

<mosaic_0001>
module attributes {stable_mosaic.version = 11 : i64} {
  func.func @_gen_kernel(%arg0: i32, %arg1: i32, %arg2: memref<8x200x256xf32, #tpu.memory_space<vmem>>, %arg3: memref<256x128xf32, #tpu.memory_space<vmem>>, %arg4: memref<1x128xf32, #tpu.memory_space<vmem>>, %arg5: memref<128x64xf32, #tpu.memory_space<vmem>>, %arg6: memref<1x64xf32, #tpu.memory_space<vmem>>, %arg7: memref<64x32xf32, #tpu.memory_space<vmem>>, %arg8: memref<1x32xf32, #tpu.memory_space<vmem>>, %arg9: memref<32x8xf32, #tpu.memory_space<vmem>>, %arg10: memref<1x8xf32, #tpu.memory_space<vmem>>, %arg11: memref<8x8xf32, #tpu.memory_space<vmem>>, %arg12: memref<8x256xf32, #tpu.memory_space<vmem>>) attributes {dimension_semantics = [#tpu.dimension_semantics<parallel>, #tpu.dimension_semantics<arbitrary>], iteration_bounds = array<i64: 2, 1>, scalar_prefetch = 0 : i64, scratch_operands = 1 : i64, tpu.core_type = #tpu.core_type<tc>, window_params = [{transform_indices = @transform_0, window_bounds = array<i64: 8, 200, 256>}, {pipeline_mode = #tpu.pipeline_mode<synchronous>, transform_indices = @transform_1, window_bounds = array<i64: 256, 128>}, {pipeline_mode = #tpu.pipeline_mode<synchronous>, transform_indices = @transform_2, window_bounds = array<i64: 1, 128>}, {pipeline_mode = #tpu.pipeline_mode<synchronous>, transform_indices = @transform_3, window_bounds = array<i64: 128, 64>}, {pipeline_mode = #tpu.pipeline_mode<synchronous>, transform_indices = @transform_4, window_bounds = array<i64: 1, 64>}, {pipeline_mode = #tpu.pipeline_mode<synchronous>, transform_indices = @transform_5, window_bounds = array<i64: 64, 32>}, {pipeline_mode = #tpu.pipeline_mode<synchronous>, transform_indices = @transform_6, window_bounds = array<i64: 1, 32>}, {pipeline_mode = #tpu.pipeline_mode<synchronous>, transform_indices = @transform_7, window_bounds = array<i64: 32, 8>}, {pipeline_mode = #tpu.pipeline_mode<synchronous>, transform_indices = @transform_8, window_bounds = array<i64: 1, 8>}, {transform_indices = @transform_9, window_bounds = array<i64: 8, 8>}]} {
    %c0_i32 = arith.constant 0 : i32
    %0 = arith.cmpi eq, %arg1, %c0_i32 : i32
    %1 = arith.extui %0 : i1 to i32
    %c0_i32_0 = arith.constant 0 : i32
    %2 = arith.cmpi ne, %1, %c0_i32_0 : i32
    scf.if %2 {
      %cst_9 = arith.constant 0xFF800000 : f32
      %11 = vector.broadcast %cst_9 : f32 to vector<8x256xf32>
      %c0_10 = arith.constant 0 : index
      %c0_11 = arith.constant 0 : index
      %12 = vector.load %arg12[%c0_10, %c0_11] : memref<8x256xf32, #tpu.memory_space<vmem>>, vector<8x256xf32>
      tpu.vector_store %arg12[%c0_10, %c0_11], %11 {strides = array<i32>} : memref<8x256xf32, #tpu.memory_space<vmem>>, vector<8x256xf32>,
    } else {
    }
    %c0 = arith.constant 0 : index
    %c0_1 = arith.constant 0 : index
    %c0_2 = arith.constant 0 : index
    %3 = vector.load %arg2[%c0, %c0_1, %c0_2] : memref<8x200x256xf32, #tpu.memory_space<vmem>>, vector<8x200x256xf32>
    %cst = arith.constant dense<0xFF800000> : vector<8x256xf32>
    %4 = vector.multi_reduction <maximumf>, %3, %cst [1] : vector<8x200x256xf32> to vector<8x256xf32>
    %c0_3 = arith.constant 0 : index
    %c0_4 = arith.constant 0 : index
    %5 = vector.load %arg12[%c0_3, %c0_4] : memref<8x256xf32, #tpu.memory_space<vmem>>, vector<8x256xf32>
    %6 = arith.maximumf %5, %4 : vector<8x256xf32>
    %c0_5 = arith.constant 0 : index
    %c0_6 = arith.constant 0 : index
    %7 = vector.load %arg12[%c0_5, %c0_6] : memref<8x256xf32, #tpu.memory_space<vmem>>, vector<8x256xf32>
    tpu.vector_store %arg12[%c0_5, %c0_6], %6 {strides = array<i32>} : memref<8x256xf32, #tpu.memory_space<vmem>>, vector<8x256xf32>,
    %c0_i32_7 = arith.constant 0 : i32
    %8 = arith.cmpi eq, %arg1, %c0_i32_7 : i32
    %9 = arith.extui %8 : i1 to i32
    %c0_i32_8 = arith.constant 0 : i32
    %10 = arith.cmpi ne, %9, %c0_i32_8 : i32
    scf.if %10 {
      %c0_9 = arith.constant 0 : index
      %c0_10 = arith.constant 0 : index
      %11 = vector.load %arg12[%c0_9, %c0_10] : memref<8x256xf32, #tpu.memory_space<vmem>>, vector<8x256xf32>
      %c0_11 = arith.constant 0 : index
      %c0_12 = arith.constant 0 : index
      %12 = vector.load %arg3[%c0_11, %c0_12] : memref<256x128xf32, #tpu.memory_space<vmem>>, vector<256x128xf32>
      %cst_13 = arith.constant dense<0.000000e+00> : vector<8x128xf32>
      %13 = tpu.matmul %11, %12, %cst_13 {dimension_numbers = #tpu.dot_dimension_numbers<[1], [0], [0], [1], [0, 0, 1, 1], [], []>} : vector<8x256xf32>, vector<256x128xf32>, vector<8x128xf32> -> vector<8x128xf32>
      %c0_14 = arith.constant 0 : index
      %c0_15 = arith.constant 0 : index
      %14 = vector.load %arg4[%c0_14, %c0_15] : memref<1x128xf32, #tpu.memory_space<vmem>>, vector<1x128xf32>
      %15 = vector.broadcast %14 : vector<1x128xf32> to vector<8x128xf32>
      %16 = arith.addf %13, %15 : vector<8x128xf32>
      %cst_16 = arith.constant 0.000000e+00 : f32
      %17 = vector.broadcast %cst_16 : f32 to vector<8x128xf32>
      %18 = arith.maximumf %16, %17 : vector<8x128xf32>
      %c0_17 = arith.constant 0 : index
      %c0_18 = arith.constant 0 : index
      %19 = vector.load %arg5[%c0_17, %c0_18] : memref<128x64xf32, #tpu.memory_space<vmem>>, vector<128x64xf32>
      %cst_19 = arith.constant dense<0.000000e+00> : vector<8x64xf32>
      %20 = tpu.matmul %18, %19, %cst_19 {dimension_numbers = #tpu.dot_dimension_numbers<[1], [0], [0], [1], [0, 0, 1, 1], [], []>} : vector<8x128xf32>, vector<128x64xf32>, vector<8x64xf32> -> vector<8x64xf32>
      %c0_20 = arith.constant 0 : index
      %c0_21 = arith.constant 0 : index
      %21 = vector.load %arg6[%c0_20, %c0_21] : memref<1x64xf32, #tpu.memory_space<vmem>>, vector<1x64xf32>
      %22 = vector.broadcast %21 : vector<1x64xf32> to vector<8x64xf32>
      %23 = arith.addf %20, %22 : vector<8x64xf32>
      %cst_22 = arith.constant 0.000000e+00 : f32
      %24 = vector.broadcast %cst_22 : f32 to vector<8x64xf32>
      %25 = arith.maximumf %23, %24 : vector<8x64xf32>
      %c0_23 = arith.constant 0 : index
      %c0_24 = arith.constant 0 : index
      %26 = vector.load %arg7[%c0_23, %c0_24] : memref<64x32xf32, #tpu.memory_space<vmem>>, vector<64x32xf32>
      %cst_25 = arith.constant dense<0.000000e+00> : vector<8x32xf32>
      %27 = tpu.matmul %25, %26, %cst_25 {dimension_numbers = #tpu.dot_dimension_numbers<[1], [0], [0], [1], [0, 0, 1, 1], [], []>} : vector<8x64xf32>, vector<64x32xf32>, vector<8x32xf32> -> vector<8x32xf32>
      %c0_26 = arith.constant 0 : index
      %c0_27 = arith.constant 0 : index
      %28 = vector.load %arg8[%c0_26, %c0_27] : memref<1x32xf32, #tpu.memory_space<vmem>>, vector<1x32xf32>
      %29 = vector.broadcast %28 : vector<1x32xf32> to vector<8x32xf32>
      %30 = arith.addf %27, %29 : vector<8x32xf32>
      %cst_28 = arith.constant 0.000000e+00 : f32
      %31 = vector.broadcast %cst_28 : f32 to vector<8x32xf32>
      %32 = arith.maximumf %30, %31 : vector<8x32xf32>
      %c0_29 = arith.constant 0 : index
      %c0_30 = arith.constant 0 : index
      %33 = vector.load %arg9[%c0_29, %c0_30] : memref<32x8xf32, #tpu.memory_space<vmem>>, vector<32x8xf32>
      %cst_31 = arith.constant dense<0.000000e+00> : vector<8x8xf32>
      %34 = tpu.matmul %32, %33, %cst_31 {dimension_numbers = #tpu.dot_dimension_numbers<[1], [0], [0], [1], [0, 0, 1, 1], [], []>} : vector<8x32xf32>, vector<32x8xf32>, vector<8x8xf32> -> vector<8x8xf32>
      %c0_32 = arith.constant 0 : index
      %c0_33 = arith.constant 0 : index
      %35 = vector.load %arg10[%c0_32, %c0_33] : memref<1x8xf32, #tpu.memory_space<vmem>>, vector<1x8xf32>
      %36 = vector.broadcast %35 : vector<1x8xf32> to vector<8x8xf32>
      %37 = arith.addf %34, %36 : vector<8x8xf32>
      %38 = vector.extract_strided_slice %37 {offsets = [0, 0], sizes = [8, 4], strides = [1, 1]} : vector<8x8xf32> to vector<8x4xf32>
      %39 = arith.mulf %38, %38 : vector<8x4xf32>
      %cst_34 = arith.constant dense<0.000000e+00> : vector<8xf32>
      %40 = vector.multi_reduction <add>, %39, %cst_34 [1] : vector<8x4xf32> to vector<8xf32>
      %41 = vector.shape_cast %40 : vector<8xf32> to vector<8x1xf32>
      %42 = math.rsqrt %41 : vector<8x1xf32>
      %43 = tpu.iota {dimensions = array<i32: 1>} : vector<8x8xi32>
      %c4_i32 = arith.constant 4 : i32
      %44 = vector.broadcast %c4_i32 : i32 to vector<8x8xi32>
      %45 = arith.cmpi slt, %43, %44 : vector<8x8xi32>
      %46 = vector.broadcast %42 : vector<8x1xf32> to vector<8x8xf32>
      %47 = arith.mulf %37, %46 : vector<8x8xf32>
      %48 = arith.select %45, %47, %37 : vector<8x8xi1>, vector<8x8xf32>
      %c0_35 = arith.constant 0 : index
      %c0_36 = arith.constant 0 : index
      %49 = vector.load %arg11[%c0_35, %c0_36] : memref<8x8xf32, #tpu.memory_space<vmem>>, vector<8x8xf32>
      tpu.vector_store %arg11[%c0_35, %c0_36], %48 {strides = array<i32>} : memref<8x8xf32, #tpu.memory_space<vmem>>, vector<8x8xf32>,
    } else {
    }
    return
  }
  func.func @transform_0(%arg0: i32, %arg1: i32) -> (i32, i32, i32) {
    %c0_i32 = arith.constant 0 : i32
    %c0_i32_0 = arith.constant 0 : i32
    return %arg0, %arg1, %c0_i32 : i32, i32, i32
  }
  func.func @transform_1(%arg0: i32, %arg1: i32) -> (i32, i32) {
    %c0_i32 = arith.constant 0 : i32
    %c0_i32_0 = arith.constant 0 : i32
    %c0_i32_1 = arith.constant 0 : i32
    return %c0_i32, %c0_i32_0 : i32, i32
  }
  func.func @transform_2(%arg0: i32, %arg1: i32) -> (i32, i32) {
    %c0_i32 = arith.constant 0 : i32
    %c0_i32_0 = arith.constant 0 : i32
    %c0_i32_1 = arith.constant 0 : i32
    return %c0_i32, %c0_i32_0 : i32, i32
  }
  func.func @transform_3(%arg0: i32, %arg1: i32) -> (i32, i32) {
    %c0_i32 = arith.constant 0 : i32
    %c0_i32_0 = arith.constant 0 : i32
    %c0_i32_1 = arith.constant 0 : i32
    return %c0_i32, %c0_i32_0 : i32, i32
  }
  func.func @transform_4(%arg0: i32, %arg1: i32) -> (i32, i32) {
    %c0_i32 = arith.constant 0 : i32
    %c0_i32_0 = arith.constant 0 : i32
    %c0_i32_1 = arith.constant 0 : i32
    return %c0_i32, %c0_i32_0 : i32, i32
  }
  func.func @transform_5(%arg0: i32, %arg1: i32) -> (i32, i32) {
    %c0_i32 = arith.constant 0 : i32
    %c0_i32_0 = arith.constant 0 : i32
    %c0_i32_1 = arith.constant 0 : i32
    return %c0_i32, %c0_i32_0 : i32, i32
  }
  func.func @transform_6(%arg0: i32, %arg1: i32) -> (i32, i32) {
    %c0_i32 = arith.constant 0 : i32
    %c0_i32_0 = arith.constant 0 : i32
    %c0_i32_1 = arith.constant 0 : i32
    return %c0_i32, %c0_i32_0 : i32, i32
  }
  func.func @transform_7(%arg0: i32, %arg1: i32) -> (i32, i32) {
    %c0_i32 = arith.constant 0 : i32
    %c0_i32_0 = arith.constant 0 : i32
    %c0_i32_1 = arith.constant 0 : i32
    return %c0_i32, %c0_i32_0 : i32, i32
  }
  func.func @transform_8(%arg0: i32, %arg1: i32) -> (i32, i32) {
    %c0_i32 = arith.constant 0 : i32
    %c0_i32_0 = arith.constant 0 : i32
    %c0_i32_1 = arith.constant 0 : i32
    return %c0_i32, %c0_i32_0 : i32, i32
  }
  func.func @transform_9(%arg0: i32, %arg1: i32) -> (i32, i32) {
    %c0_i32 = arith.constant 0 : i32
    %c0_i32_0 = arith.constant 0 : i32
    return %arg0, %c0_i32 : i32, i32
  }
}

</mosaic_0001>

<llo_original>
// kernel: tpu_custom_call.1
$region0: #{tpu_custom_call.1}
  #allocation0 [shape = 'u32[]', space=smem, size = 0x4, offset = 0x4, fixed_abs, tag = 'smem constant byte address 0x4 - core index']
  #allocation1 [shape = 'u32[144,128]{1,0:T(1,128)}', space=vmem, size = 0x12000, scoped, tag = 'internal scratch']
  #allocation2 [shape = 'f32[8,256]{1,0:T(8,128)}', space=vmem, size = 0x2000, scoped, tag = 'scratch operand']
  %s0 = inlined_call_operand.hbm [shape: f32[10,200,256], index: 0, kind: input, shape index: {}]
  %s1 = inlined_call_operand.hbm [shape: f32[256,128], index: 1, kind: input, shape index: {}]
  %s2 = inlined_call_operand.hbm [shape: f32[1,128], index: 2, kind: input, shape index: {}]
  %s3 = inlined_call_operand.vmem [shape: f32[128,64], index: 3, kind: input, shape index: {}]
  %s4 = inlined_call_operand.hbm [shape: f32[1,64], index: 4, kind: input, shape index: {}]
  %s5 = inlined_call_operand.vmem [shape: f32[64,32], index: 5, kind: input, shape index: {}]
  %s6 = inlined_call_operand.hbm [shape: f32[1,32], index: 6, kind: input, shape index: {}]
  %s7 = inlined_call_operand.vmem [shape: f32[32,8], index: 7, kind: input, shape index: {}]
  %s8 = inlined_call_operand.hbm [shape: f32[1,8], index: 8, kind: input, shape index: {}]
  %s9 = inlined_call_operand.vmem [shape: f32[10,8], index: 9, kind: output, shape index: {}]
  %s10 = sld [smem:[#allocation0]]
  $region101: #{tpu_custom_call.1} parent=0
    _
  %s12 = ssub.s32 1, %s10
  %s13 = scalar_select 0, %s12, %s10
  $region1: #{tpu_custom_call.1} parent=0
    #allocation3 [shape = 'u8[3276800]{0}', space=vmem, size = 0x320000, scoped, tag = 'input window, operand 0']
    #allocation4 [shape = 's32[2]{0}', space=sflag, size = 0x8, scoped, tag = 'scoped memory for tpu_custom_call.1']
    #allocation5 [shape = 'u8[131072]{0}', space=vmem, size = 0x20000, scoped, tag = 'input window, operand 1, single buffered']
    #allocation6 [shape = 's32[1]{0}', space=sflag, size = 0x4, scoped, tag = 'scoped memory for tpu_custom_call.1']
    #allocation7 [shape = 'u8[512]{0}', space=vmem, size = 0x400, scoped, tag = 'input window, operand 2, single buffered']
    #allocation8 [shape = 'u8[512]{0}', space=vmem, size = 0x400, scoped, tag = 'input window, operand 4, single buffered']
    #allocation9 [shape = 's32[1]{0}', space=sflag, size = 0x4, scoped, tag = 'scoped memory for tpu_custom_call.1']
    #allocation10 [shape = 'u8[512]{0}', space=vmem, size = 0x400, scoped, tag = 'input window, operand 6, single buffered']
    #allocation11 [shape = 'u8[512]{0}', space=vmem, size = 0x400, scoped, tag = 'input window, operand 8, single buffered']
    #allocation12 [shape = 's32[1]{0}', space=sflag, size = 0x4, scoped, tag = 'scoped memory for tpu_custom_call.1']
    %14 = vsyncpa [#allocation4], 0
    %s15 = scalar_lea.sflag [#allocation4], 1
    %16 = vsyncpa %s15, 0
    %17 = vsyncpa [#allocation6], 0
    %18 = vsyncpa [#allocation9], 0
    %19 = vsyncpa [#allocation12], 0
    loop: start=0, step=1, limit=4
    $region2: #{tpu_custom_call.1} parent=1 // loop_pre_header
      _
    $region3: #{tpu_custom_call.1} parent=1 // loop_header
      %s21 = sphi 0, %s25
      %p22 = scmp.ge.s32.totalorder %s21, 4
      %s28 = sphi 0, %s40
      %s29 = sphi 0, %s36
      %s30 = sphi 0, %s28
      %s31 = sphi 0, %s29
      %s32 = sphi 0, %s30
      %s33 = sphi 0, %s31
      %s45 = sphi 0, %s47
      %s48 = sphi 0, %s45
      %s49 = sphi 0, %s48
      %s65 = sphi 0, %s49
      %s69 = sphi 0, %s69
      %s71 = sphi 0, %s69
      %s72 = sphi 0, %s71
      %s86 = sphi 0, %s72
      %s90 = sphi 0, %s90
      %s92 = sphi 0, %s90
      %s93 = sphi 0, %s92
      %s107 = sphi 0, %s93
      %s111 = sphi 0, %s111
      %s113 = sphi 0, %s111
      %s114 = sphi 0, %s113
      %s128 = sphi 0, %s114
      %s132 = sphi 0, %s132
      %s134 = sphi 0, %s132
      %s135 = sphi 0, %s134
      %s149 = sphi 0, %s135
      %s153 = sphi 0, %s153
      %s155 = sphi 0, %s153
      %s156 = sphi 0, %s155
      %s170 = sphi 0, %s156
      %s174 = sphi 0, %s174
      %s176 = sphi 0, %s174
      %s177 = sphi 0, %s176
      %s191 = sphi 0, %s177
      %s195 = sphi 0, %s195
      %s197 = sphi 0, %s195
      %s198 = sphi 0, %s197
      %s212 = sphi 0, %s198
      %s216 = sphi 0, %s216
      %s218 = sphi 0, %s216
      %s219 = sphi 0, %s218
      %s233 = sphi 0, %s219
      %s239 = sphi 0, %s241
      %s242 = sphi 0, %s239
      %s243 = sphi 0, %s242
      %s259 = sphi 0, %s243
    $region4: #{tpu_custom_call.1} parent=1 // loop_header_branch
      %24 = sbr.rel (%p22) target = $region8
    $region5: #{tpu_custom_call.1} parent=1 // loop_body
      %s26 = ssub.s32 %s21, 1
      %s27 = ssub.s32 %s21, 2
      %s34 = sadd.s32 1, %s29
      %p35 = scmp.ge.s32.totalorder %s34, 1
      %s36 = scalar_select %p35, 0, %s34
      %s37 = sadd.s32 1, %s28
      %s38 = scalar_select %p35, %s37, %s28
      %p39 = scmp.ge.s32.totalorder %s38, 2
      %s40 = scalar_select %p39, 0, %s38
      %s41 = ssub.s32 %s28, %s40
      %s42 = ssub.s32 %s29, %s36
      %s43 = sor.u32 %s41, %s42
      %p44 = scmp.eq.s32.totalorder %s43, 0
      %s46 = sadd.s32 %s45, 1
      %s47 = scalar_select %p44, %s45, %s46
      %p50 = pneg %p44
      %p51 = scmp.eq.s32.totalorder %s21, 1
      %p52 = por %p50, %p51
      %p53 = scmp.ne.s32.totalorder %s45, %s48
      %p54 = scmp.eq.s32.totalorder %s21, 0
      %p55 = por %p53, %p54
      %p56 = scmp.ne.s32.totalorder %s45, %s48
      %p57 = scmp.eq.s32.totalorder %s26, 1
      %p58 = por %p56, %p57
      %p59 = scmp.ne.s32.totalorder %s48, %s49
      %p60 = scmp.eq.s32.totalorder %s26, 0
      %p61 = por %p59, %p60
      %p62 = scmp.ne.s32.totalorder %s48, %s49
      %p63 = scmp.eq.s32.totalorder %s27, 1
      %p64 = por %p62, %p63
      %p66 = scmp.ne.s32.totalorder %s49, %s65
      %p67 = scmp.eq.s32.totalorder %s27, 0
      %p68 = por %p66, %p67
      %s70 = sadd.s32 %s69, 1
      %p73 = scmp.eq.s32.totalorder %s21, 1
      %p74 = scmp.ne.s32.totalorder %s69, %s71
      %p75 = scmp.eq.s32.totalorder %s21, 0
      %p76 = por %p74, %p75
      %p77 = scmp.ne.s32.totalorder %s69, %s71
      %p78 = scmp.eq.s32.totalorder %s26, 1
      %p79 = por %p77, %p78
      %p80 = scmp.ne.s32.totalorder %s71, %s72
      %p81 = scmp.eq.s32.totalorder %s26, 0
      %p82 = por %p80, %p81
      %p83 = scmp.ne.s32.totalorder %s71, %s72
      %p84 = scmp.eq.s32.totalorder %s27, 1
      %p85 = por %p83, %p84
      %p87 = scmp.ne.s32.totalorder %s72, %s86
      %p88 = scmp.eq.s32.totalorder %s27, 0
      %p89 = por %p87, %p88
      %s91 = sadd.s32 %s90, 1
      %p94 = scmp.eq.s32.totalorder %s21, 1
      %p95 = scmp.ne.s32.totalorder %s90, %s92
      %p96 = scmp.eq.s32.totalorder %s21, 0
      %p97 = por %p95, %p96
      %p98 = scmp.ne.s32.totalorder %s90, %s92
      %p99 = scmp.eq.s32.totalorder %s26, 1
      %p100 = por %p98, %p99
      %p101 = scmp.ne.s32.totalorder %s92, %s93
      %p102 = scmp.eq.s32.totalorder %s26, 0
      %p103 = por %p101, %p102
      %p104 = scmp.ne.s32.totalorder %s92, %s93
      %p105 = scmp.eq.s32.totalorder %s27, 1
      %p106 = por %p104, %p105
      %p108 = scmp.ne.s32.totalorder %s93, %s107
      %p109 = scmp.eq.s32.totalorder %s27, 0
      %p110 = por %p108, %p109
      %s112 = sadd.s32 %s111, 1
      %p115 = scmp.eq.s32.totalorder %s21, 1
      %p116 = scmp.ne.s32.totalorder %s111, %s113
      %p117 = scmp.eq.s32.totalorder %s21, 0
      %p118 = por %p116, %p117
      %p119 = scmp.ne.s32.totalorder %s111, %s113
      %p120 = scmp.eq.s32.totalorder %s26, 1
      %p121 = por %p119, %p120
      %p122 = scmp.ne.s32.totalorder %s113, %s114
      %p123 = scmp.eq.s32.totalorder %s26, 0
      %p124 = por %p122, %p123
      %p125 = scmp.ne.s32.totalorder %s113, %s114
      %p126 = scmp.eq.s32.totalorder %s27, 1
      %p127 = por %p125, %p126
      %p129 = scmp.ne.s32.totalorder %s114, %s128
      %p130 = scmp.eq.s32.totalorder %s27, 0
      %p131 = por %p129, %p130
      %s133 = sadd.s32 %s132, 1
      %p136 = scmp.eq.s32.totalorder %s21, 1
      %p137 = scmp.ne.s32.totalorder %s132, %s134
      %p138 = scmp.eq.s32.totalorder %s21, 0
      %p139 = por %p137, %p138
      %p140 = scmp.ne.s32.totalorder %s132, %s134
      %p141 = scmp.eq.s32.totalorder %s26, 1
      %p142 = por %p140, %p141
      %p143 = scmp.ne.s32.totalorder %s134, %s135
      %p144 = scmp.eq.s32.totalorder %s26, 0
      %p145 = por %p143, %p144
      %p146 = scmp.ne.s32.totalorder %s134, %s135
      %p147 = scmp.eq.s32.totalorder %s27, 1
      %p148 = por %p146, %p147
      %p150 = scmp.ne.s32.totalorder %s135, %s149
      %p151 = scmp.eq.s32.totalorder %s27, 0
      %p152 = por %p150, %p151
      %s154 = sadd.s32 %s153, 1
      %p157 = scmp.eq.s32.totalorder %s21, 1
      %p158 = scmp.ne.s32.totalorder %s153, %s155
      %p159 = scmp.eq.s32.totalorder %s21, 0
      %p160 = por %p158, %p159
      %p161 = scmp.ne.s32.totalorder %s153, %s155
      %p162 = scmp.eq.s32.totalorder %s26, 1
      %p163 = por %p161, %p162
      %p164 = scmp.ne.s32.totalorder %s155, %s156
      %p165 = scmp.eq.s32.totalorder %s26, 0
      %p166 = por %p164, %p165
      %p167 = scmp.ne.s32.totalorder %s155, %s156
      %p168 = scmp.eq.s32.totalorder %s27, 1
      %p169 = por %p167, %p168
      %p171 = scmp.ne.s32.totalorder %s156, %s170
      %p172 = scmp.eq.s32.totalorder %s27, 0
      %p173 = por %p171, %p172
      %s175 = sadd.s32 %s174, 1
      %p178 = scmp.eq.s32.totalorder %s21, 1
      %p179 = scmp.ne.s32.totalorder %s174, %s176
      %p180 = scmp.eq.s32.totalorder %s21, 0
      %p181 = por %p179, %p180
      %p182 = scmp.ne.s32.totalorder %s174, %s176
      %p183 = scmp.eq.s32.totalorder %s26, 1
      %p184 = por %p182, %p183
      %p185 = scmp.ne.s32.totalorder %s176, %s177
      %p186 = scmp.eq.s32.totalorder %s26, 0
      %p187 = por %p185, %p186
      %p188 = scmp.ne.s32.totalorder %s176, %s177
      %p189 = scmp.eq.s32.totalorder %s27, 1
      %p190 = por %p188, %p189
      %p192 = scmp.ne.s32.totalorder %s177, %s191
      %p193 = scmp.eq.s32.totalorder %s27, 0
      %p194 = por %p192, %p193
      %s196 = sadd.s32 %s195, 1
      %p199 = scmp.eq.s32.totalorder %s21, 1
      %p200 = scmp.ne.s32.totalorder %s195, %s197
      %p201 = scmp.eq.s32.totalorder %s21, 0
      %p202 = por %p200, %p201
      %p203 = scmp.ne.s32.totalorder %s195, %s197
      %p204 = scmp.eq.s32.totalorder %s26, 1
      %p205 = por %p203, %p204
      %p206 = scmp.ne.s32.totalorder %s197, %s198
      %p207 = scmp.eq.s32.totalorder %s26, 0
      %p208 = por %p206, %p207
      %p209 = scmp.ne.s32.totalorder %s197, %s198
      %p210 = scmp.eq.s32.totalorder %s27, 1
      %p211 = por %p209, %p210
      %p213 = scmp.ne.s32.totalorder %s198, %s212
      %p214 = scmp.eq.s32.totalorder %s27, 0
      %p215 = por %p213, %p214
      %s217 = sadd.s32 %s216, 1
      %p220 = scmp.eq.s32.totalorder %s21, 1
      %p221 = scmp.ne.s32.totalorder %s216, %s218
      %p222 = scmp.eq.s32.totalorder %s21, 0
      %p223 = por %p221, %p222
      %p224 = scmp.ne.s32.totalorder %s216, %s218
      %p225 = scmp.eq.s32.totalorder %s26, 1
      %p226 = por %p224, %p225
      %p227 = scmp.ne.s32.totalorder %s218, %s219
      %p228 = scmp.eq.s32.totalorder %s26, 0
      %p229 = por %p227, %p228
      %p230 = scmp.ne.s32.totalorder %s218, %s219
      %p231 = scmp.eq.s32.totalorder %s27, 1
      %p232 = por %p230, %p231
      %p234 = scmp.ne.s32.totalorder %s219, %s233
      %p235 = scmp.eq.s32.totalorder %s27, 0
      %p236 = por %p234, %p235
      %s237 = ssub.s32 %s28, %s40
      %p238 = scmp.eq.s32.totalorder %s237, 0
      %s240 = sadd.s32 %s239, 1
      %s241 = scalar_select %p238, %s239, %s240
      %p244 = pneg %p238
      %p245 = scmp.eq.s32.totalorder %s21, 1
      %p246 = por %p244, %p245
      %p247 = scmp.ne.s32.totalorder %s239, %s242
      %p248 = scmp.eq.s32.totalorder %s21, 0
      %p249 = por %p247, %p248
      %p250 = scmp.ne.s32.totalorder %s239, %s242
      %p251 = scmp.eq.s32.totalorder %s26, 1
      %p252 = por %p250, %p251
      %p253 = scmp.ne.s32.totalorder %s242, %s243
      %p254 = scmp.eq.s32.totalorder %s26, 0
      %p255 = por %p253, %p254
      %p256 = scmp.ne.s32.totalorder %s242, %s243
      %p257 = scmp.eq.s32.totalorder %s27, 1
      %p258 = por %p256, %p257
      %p260 = scmp.ne.s32.totalorder %s243, %s259
      %p261 = scmp.eq.s32.totalorder %s27, 0
      %p262 = por %p260, %p261
      %p263 = scmp.le.s32.totalorder 1, %s21
      %p264 = scmp.lt.s32.totalorder %s21, 3
      %p265 = pnand %p263, %p264
      %p266 = pneg %p265
      // Predicated region
      $region9: #{tpu_custom_call.1} parent=5 // pred_check
        _
      $region10: #{tpu_custom_call.1} parent=5 // pred_check_branch
        %268 = sbr.rel (%p265) target = $region12
      $region11: #{tpu_custom_call.1} parent=5 // pred_region
        %s269 = ssub.s32 %s21, 1
        // Predicated region
        $region13: #{tpu_custom_call.1} parent=11 // pred_check
          %p270 = pneg %p82
        $region14: #{tpu_custom_call.1} parent=11 // pred_check_branch
          %272 = sbr.rel (%p270) target = $region16
        $region15: #{tpu_custom_call.1} parent=11 // pred_region
          %s274 = ssub.s32 4096, 4096
          %275 = vsyncadd [#allocation6], %s274
          %s276 = sshll.u32 [#allocation5], 4
          %s277 = int_to_ptr.vmem [resolvable:$true] %s276
          %282 = dma.hbm_to_vmem [thread:$0]  %s1, 4096, %s277, [#allocation6], 128, 128, 8
        $region16: #{tpu_custom_call.1} parent=11 // pred_fallthru
          _
        // Predicated region
        $region17: #{tpu_custom_call.1} parent=11 // pred_check
          %p283 = pneg %p103
        $region18: #{tpu_custom_call.1} parent=11 // pred_check_branch
          %285 = sbr.rel (%p283) target = $region20
        $region19: #{tpu_custom_call.1} parent=11 // pred_region
          %s287 = ssub.s32 16, 16
          %288 = vsyncadd [#allocation6], %s287
          %s290 = sshll.u32 [#allocation7], 4
          %s291 = int_to_ptr.vmem [resolvable:$true] %s290
          %293 = dma.hbm_to_vmem [thread:$0]  %s2, 16, %s291, [#allocation6]
        $region20: #{tpu_custom_call.1} parent=11 // pred_fallthru
          _
        // Predicated region
        $region21: #{tpu_custom_call.1} parent=11 // pred_check
          %p294 = pneg %p124
        $region22: #{tpu_custom_call.1} parent=11 // pred_check_branch
          %296 = sbr.rel (%p294) target = $region24
        $region23: #{tpu_custom_call.1} parent=11 // pred_region
          _
        $region24: #{tpu_custom_call.1} parent=11 // pred_fallthru
          _
        // Predicated region
        $region25: #{tpu_custom_call.1} parent=11 // pred_check
          %p297 = pneg %p145
        $region26: #{tpu_custom_call.1} parent=11 // pred_check_branch
          %299 = sbr.rel (%p297) target = $region28
        $region27: #{tpu_custom_call.1} parent=11 // pred_region
          %s301 = ssub.s32 16, 16
          %302 = vsyncadd [#allocation9], %s301
          %s304 = sshll.u32 [#allocation8], 4
          %s305 = int_to_ptr.vmem [resolvable:$true] %s304
          %307 = dma.hbm_to_vmem [thread:$0]  %s4, 16, %s305, [#allocation9]
        $region28: #{tpu_custom_call.1} parent=11 // pred_fallthru
          _
        // Predicated region
        $region29: #{tpu_custom_call.1} parent=11 // pred_check
          %p308 = pneg %p166
        $region30: #{tpu_custom_call.1} parent=11 // pred_check_branch
          %310 = sbr.rel (%p308) target = $region32
        $region31: #{tpu_custom_call.1} parent=11 // pred_region
          _
        $region32: #{tpu_custom_call.1} parent=11 // pred_fallthru
          _
        // Predicated region
        $region33: #{tpu_custom_call.1} parent=11 // pred_check
          %p311 = pneg %p187
        $region34: #{tpu_custom_call.1} parent=11 // pred_check_branch
          %313 = sbr.rel (%p311) target = $region36
        $region35: #{tpu_custom_call.1} parent=11 // pred_region
          %s315 = ssub.s32 16, 16
          %316 = vsyncadd [#allocation9], %s315
          %s318 = sshll.u32 [#allocation10], 4
          %s319 = int_to_ptr.vmem [resolvable:$true] %s318
          %321 = dma.hbm_to_vmem [thread:$0]  %s6, 16, %s319, [#allocation9]
        $region36: #{tpu_custom_call.1} parent=11 // pred_fallthru
          _
        // Predicated region
        $region37: #{tpu_custom_call.1} parent=11 // pred_check
          %p322 = pneg %p208
        $region38: #{tpu_custom_call.1} parent=11 // pred_check_branch
          %324 = sbr.rel (%p322) target = $region40
        $region39: #{tpu_custom_call.1} parent=11 // pred_region
          _
        $region40: #{tpu_custom_call.1} parent=11 // pred_fallthru
          _
        // Predicated region
        $region41: #{tpu_custom_call.1} parent=11 // pred_check
          %p325 = pneg %p229
        $region42: #{tpu_custom_call.1} parent=11 // pred_check_branch
          %327 = sbr.rel (%p325) target = $region44
        $region43: #{tpu_custom_call.1} parent=11 // pred_region
          %s329 = ssub.s32 16, 16
          %330 = vsyncadd [#allocation12], %s329
          %s332 = sshll.u32 [#allocation11], 4
          %s333 = int_to_ptr.vmem [resolvable:$true] %s332
          %335 = dma.hbm_to_vmem [thread:$0]  %s8, 16, %s333, [#allocation12]
        $region44: #{tpu_custom_call.1} parent=11 // pred_fallthru
          _
      $region12: #{tpu_custom_call.1} parent=5 // pred_fallthru
        _
      %p336 = scmp.lt.s32.totalorder %s21, 2
      // Predicated region
      $region45: #{tpu_custom_call.1} parent=5 // pred_check
        %p337 = pneg %p336
      $region46: #{tpu_custom_call.1} parent=5 // pred_check_branch
        %339 = sbr.rel (%p337) target = $region48
      $region47: #{tpu_custom_call.1} parent=5 // pred_region
        // Predicated region
        $region49: #{tpu_custom_call.1} parent=47 // pred_check
          %p340 = pneg %p55
        $region50: #{tpu_custom_call.1} parent=47 // pred_check_branch
          %342 = sbr.rel (%p340) target = $region52
        $region51: #{tpu_custom_call.1} parent=47 // pred_region
          %s343 = sand.u32 %s45, 1
          %s344 = scalar_lea.sflag [#allocation4], %s343
          %s345 = sand.u32 %s45, 1
          %s346 = smul.addr %s345, 3200
          %s347 = scalar_lea.vmem [#allocation3], %s346
          %s348 = smul.u32 8, %s28
          %s349 = smul.u32 25, %s29
          %s350 = ssub.s32 10, %s348
          %p351 = scmp.lt.s32.totalorder %s350, 8
          %s352 = scalar_select %p351, %s350, 8
          %s353 = smul.u32 128, %s352
          %s354 = smul.u32 %s353, 25
          %s355 = smul.u32 %s354, 2
          %s357 = ssub.s32 51200, %s355
          %358 = vsyncadd %s344, %s357
          %p359 = scmp.ne.s32.totalorder 0, %s355
          %s360 = smul.addr %s349, 2
          %s361 = smul.addr %s348, 50
          %s362 = sadd.s32 %s360, %s361
          %s363 = smul.addr %s362, 128
          %s364 = scalar_lea.hbm %s0, %s363
          %s365 = smul.u32 %s352, 25
          %s366 = smul.u32 16, %s365
          %s367 = sshll.u32 %s347, 4
          %s368 = int_to_ptr.vmem [resolvable:$true] %s367
          %s369 = sshll.u32 %s366, 4
          %373 = dma.hbm_to_vmem [thread:$0]  (%p359), %s364, %s369, %s368, %s344, 256, 256, 16
        $region52: #{tpu_custom_call.1} parent=47 // pred_fallthru
          _
      $region48: #{tpu_custom_call.1} parent=5 // pred_fallthru
        _
      %p374 = scmp.le.s32.totalorder 1, %s21
      %p375 = scmp.lt.s32.totalorder %s21, 3
      %p376 = pnand %p374, %p375
      %p377 = pneg %p376
      // Predicated region
      $region53: #{tpu_custom_call.1} parent=5 // pred_check
        _
      $region54: #{tpu_custom_call.1} parent=5 // pred_check_branch
        %379 = sbr.rel (%p376) target = $region56
      $region55: #{tpu_custom_call.1} parent=5 // pred_region
        %s380 = ssub.s32 %s21, 1
        %s381 = sand.u32 %s48, 1
        %s382 = scalar_lea.sflag [#allocation4], %s381
        %s383 = sand.u32 %s48, 1
        %s384 = smul.addr %s383, 3200
        %s385 = scalar_lea.vmem [#allocation3], %s384
        // Predicated region
        $region57: #{tpu_custom_call.1} parent=55 // pred_check
          %p386 = pneg %p61
        $region58: #{tpu_custom_call.1} parent=55 // pred_check_branch
          %388 = sbr.rel (%p386) target = $region60
        $region59: #{tpu_custom_call.1} parent=55 // pred_region
          %389 = dma.done %s382, 51200
        $region60: #{tpu_custom_call.1} parent=55 // pred_fallthru
          _
        // Predicated region
        $region61: #{tpu_custom_call.1} parent=55 // pred_check
          %p390 = pneg %p82
        $region62: #{tpu_custom_call.1} parent=55 // pred_check_branch
          %392 = sbr.rel (%p390) target = $region64
        $region63: #{tpu_custom_call.1} parent=55 // pred_region
          %393 = dma.done [#allocation6], 4096
        $region64: #{tpu_custom_call.1} parent=55 // pred_fallthru
          _
        // Predicated region
        $region65: #{tpu_custom_call.1} parent=55 // pred_check
          %p394 = pneg %p103
        $region66: #{tpu_custom_call.1} parent=55 // pred_check_branch
          %396 = sbr.rel (%p394) target = $region68
        $region67: #{tpu_custom_call.1} parent=55 // pred_region
          %397 = dma.done [#allocation6], 16
        $region68: #{tpu_custom_call.1} parent=55 // pred_fallthru
          _
        // Predicated region
        $region69: #{tpu_custom_call.1} parent=55 // pred_check
          %p398 = pneg %p145
        $region70: #{tpu_custom_call.1} parent=55 // pred_check_branch
          %400 = sbr.rel (%p398) target = $region72
        $region71: #{tpu_custom_call.1} parent=55 // pred_region
          %401 = dma.done [#allocation9], 16
        $region72: #{tpu_custom_call.1} parent=55 // pred_fallthru
          _
        // Predicated region
        $region73: #{tpu_custom_call.1} parent=55 // pred_check
          %p402 = pneg %p187
        $region74: #{tpu_custom_call.1} parent=55 // pred_check_branch
          %404 = sbr.rel (%p402) target = $region76
        $region75: #{tpu_custom_call.1} parent=55 // pred_region
          %405 = dma.done [#allocation9], 16
        $region76: #{tpu_custom_call.1} parent=55 // pred_fallthru
          _
        // Predicated region
        $region77: #{tpu_custom_call.1} parent=55 // pred_check
          %p406 = pneg %p229
        $region78: #{tpu_custom_call.1} parent=55 // pred_check_branch
          %408 = sbr.rel (%p406) target = $region80
        $region79: #{tpu_custom_call.1} parent=55 // pred_region
          %409 = dma.done [#allocation12], 16
        $region80: #{tpu_custom_call.1} parent=55 // pred_fallthru
          _
        %s410 = sand.u32 %s48, 1
        %s411 = scalar_lea.sflag [#allocation4], %s410
        %s412 = sand.u32 %s48, 1
        %s413 = smul.addr %s412, 3200
        %s414 = scalar_lea.vmem [#allocation3], %s413
        %p415 = pneg %p61
        %p416 = pneg %p58
        %p417 = pneg %p82
        %p418 = pneg %p79
        %p419 = pneg %p103
        %p420 = pneg %p100
        %p421 = pneg %p124
        %p422 = pneg %p121
        %p423 = pneg %p145
        %p424 = pneg %p142
        %p425 = pneg %p166
        %p426 = pneg %p163
        %p427 = pneg %p187
        %p428 = pneg %p184
        %p429 = pneg %p208
        %p430 = pneg %p205
        %p431 = pneg %p229
        %p432 = pneg %p226
        %p433 = pneg %p255
        %p434 = pneg %p252
        %p435 = scmp.lt.s32.totalorder %s30, 1
        %s436 = scalar_select %p435, %s30, 1
        %s437 = smul.addr %s436, 8
        %s438 = scalar_lea.vmem %s9, %s437
        %s439 = smul.u32 8, %s30
        %s440 = smul.u32 25, %s31
        %s441 = ssub.s32 10, %s439
        %p442 = scmp.lt.s32.totalorder %s441, 8
        %s443 = scalar_select %p442, %s441, 8
        %s444 = smul.u32 128, %s443
        %s445 = smul.u32 %s444, 25
        %s446 = smul.u32 %s445, 2
        %p447 = scmp.lt.s32.totalorder %s30, 1
        %s448 = scalar_select %p447, %s30, 1
        %s449 = smul.addr %s448, 8
        %s450 = scalar_lea.vmem %s9, %s449
        %p451 = scmp.eq.s32.totalorder %s31, 0
        // Predicated region
        $region81: #{tpu_custom_call.1} parent=55 // pred_check
          %p452 = pneg %p451
        $region82: #{tpu_custom_call.1} parent=55 // pred_check_branch
          %454 = sbr.rel (%p452) target = $region84
        $region83: #{tpu_custom_call.1} parent=55 // pred_region
          %455 = vst [vmem:[#allocation2] sm:$0xff] -inf
          %456 = vst [vmem:[#allocation2 + $0x8] sm:$0xff] -inf
        $region84: #{tpu_custom_call.1} parent=55 // pred_fallthru
          _
        %v457 = vld [vmem:[%s385] sm:$0xff]
        %v458 = vld [vmem:[%s385 + $0x8] sm:$0xff]
        %v459 = vld [vmem:[%s385 + $0x10] sm:$0xff]
        %v460 = vld [vmem:[%s385 + $0x18] sm:$0xff]
        %v461 = vld [vmem:[%s385 + $0x20] sm:$0xff]
        %v462 = vld [vmem:[%s385 + $0x28] sm:$0xff]
        %v463 = vld [vmem:[%s385 + $0x30] sm:$0xff]
        %v464 = vld [vmem:[%s385 + $0x38] sm:$0xff]
        %v465 = vld [vmem:[%s385 + $0x40] sm:$0xff]
        %v466 = vld [vmem:[%s385 + $0x48] sm:$0xff]
        %v467 = vld [vmem:[%s385 + $0x50] sm:$0xff]
        %v468 = vld [vmem:[%s385 + $0x58] sm:$0xff]
        %v469 = vld [vmem:[%s385 + $0x60] sm:$0xff]
        %v470 = vld [vmem:[%s385 + $0x68] sm:$0xff]
        %v471 = vld [vmem:[%s385 + $0x70] sm:$0xff]
        %v472 = vld [vmem:[%s385 + $0x78] sm:$0xff]
        %v473 = vld [vmem:[%s385 + $0x80] sm:$0xff]
        %v474 = vld [vmem:[%s385 + $0x88] sm:$0xff]
        %v475 = vld [vmem:[%s385 + $0x90] sm:$0xff]
        %v476 = vld [vmem:[%s385 + $0x98] sm:$0xff]
        %v477 = vld [vmem:[%s385 + $0xa0] sm:$0xff]
        %v478 = vld [vmem:[%s385 + $0xa8] sm:$0xff]
        %v479 = vld [vmem:[%s385 + $0xb0] sm:$0xff]
        %v480 = vld [vmem:[%s385 + $0xb8] sm:$0xff]
        %v481 = vld [vmem:[%s385 + $0xc0] sm:$0xff]
        %v482 = vld [vmem:[%s385 + $0xc8] sm:$0xff]
        %v483 = vld [vmem:[%s385 + $0xd0] sm:$0xff]
        %v484 = vld [vmem:[%s385 + $0xd8] sm:$0xff]
        %v485 = vld [vmem:[%s385 + $0xe0] sm:$0xff]
        %v486 = vld [vmem:[%s385 + $0xe8] sm:$0xff]
        %v487 = vld [vmem:[%s385 + $0xf0] sm:$0xff]
        %v488 = vld [vmem:[%s385 + $0xf8] sm:$0xff]
        %v489 = vld [vmem:[%s385 + $0x100] sm:$0xff]
        %v490 = vld [vmem:[%s385 + $0x108] sm:$0xff]
        %v491 = vld [vmem:[%s385 + $0x110] sm:$0xff]
        %v492 = vld [vmem:[%s385 + $0x118] sm:$0xff]
        %v493 = vld [vmem:[%s385 + $0x120] sm:$0xff]
        %v494 = vld [vmem:[%s385 + $0x128] sm:$0xff]
        %v495 = vld [vmem:[%s385 + $0x130] sm:$0xff]
        %v496 = vld [vmem:[%s385 + $0x138] sm:$0xff]
        %v497 = vld [vmem:[%s385 + $0x140] sm:$0xff]
        %v498 = vld [vmem:[%s385 + $0x148] sm:$0xff]
        %v499 = vld [vmem:[%s385 + $0x150] sm:$0xff]
        %v500 = vld [vmem:[%s385 + $0x158] sm:$0xff]
        %v501 = vld [vmem:[%s385 + $0x160] sm:$0xff]
        %v502 = vld [vmem:[%s385 + $0x168] sm:$0xff]
        %v503 = vld [vmem:[%s385 + $0x170] sm:$0xff]
        %v504 = vld [vmem:[%s385 + $0x178] sm:$0xff]
        %v505 = vld [vmem:[%s385 + $0x180] sm:$0xff]
        %v506 = vld [vmem:[%s385 + $0x188] sm:$0xff]
        %v507 = vld [vmem:[%s385 + $0x190] sm:$0xff]
        %v508 = vld [vmem:[%s385 + $0x198] sm:$0xff]
        %v509 = vld [vmem:[%s385 + $0x1a0] sm:$0xff]
        %v510 = vld [vmem:[%s385 + $0x1a8] sm:$0xff]
        %v511 = vld [vmem:[%s385 + $0x1b0] sm:$0xff]
        %v512 = vld [vmem:[%s385 + $0x1b8] sm:$0xff]
        %v513 = vld [vmem:[%s385 + $0x1c0] sm:$0xff]
        %v514 = vld [vmem:[%s385 + $0x1c8] sm:$0xff]
        %v515 = vld [vmem:[%s385 + $0x1d0] sm:$0xff]
        %v516 = vld [vmem:[%s385 + $0x1d8] sm:$0xff]
        %v517 = vld [vmem:[%s385 + $0x1e0] sm:$0xff]
        %v518 = vld [vmem:[%s385 + $0x1e8] sm:$0xff]
        %v519 = vld [vmem:[%s385 + $0x1f0] sm:$0xff]
        %v520 = vld [vmem:[%s385 + $0x1f8] sm:$0xff]
        %v521 = vld [vmem:[%s385 + $0x200] sm:$0xff]
        %v522 = vld [vmem:[%s385 + $0x208] sm:$0xff]
        %v523 = vld [vmem:[%s385 + $0x210] sm:$0xff]
        %v524 = vld [vmem:[%s385 + $0x218] sm:$0xff]
        %v525 = vld [vmem:[%s385 + $0x220] sm:$0xff]
        %v526 = vld [vmem:[%s385 + $0x228] sm:$0xff]
        %v527 = vld [vmem:[%s385 + $0x230] sm:$0xff]
        %v528 = vld [vmem:[%s385 + $0x238] sm:$0xff]
        %v529 = vld [vmem:[%s385 + $0x240] sm:$0xff]
        %v530 = vld [vmem:[%s385 + $0x248] sm:$0xff]
        %v531 = vld [vmem:[%s385 + $0x250] sm:$0xff]
        %v532 = vld [vmem:[%s385 + $0x258] sm:$0xff]
        %v533 = vld [vmem:[%s385 + $0x260] sm:$0xff]
        %v534 = vld [vmem:[%s385 + $0x268] sm:$0xff]
        %v535 = vld [vmem:[%s385 + $0x270] sm:$0xff]
        %v536 = vld [vmem:[%s385 + $0x278] sm:$0xff]
        %v537 = vld [vmem:[%s385 + $0x280] sm:$0xff]
        %v538 = vld [vmem:[%s385 + $0x288] sm:$0xff]
        %v539 = vld [vmem:[%s385 + $0x290] sm:$0xff]
        %v540 = vld [vmem:[%s385 + $0x298] sm:$0xff]
        %v541 = vld [vmem:[%s385 + $0x2a0] sm:$0xff]
        %v542 = vld [vmem:[%s385 + $0x2a8] sm:$0xff]
        %v543 = vld [vmem:[%s385 + $0x2b0] sm:$0xff]
        %v544 = vld [vmem:[%s385 + $0x2b8] sm:$0xff]
        %v545 = vld [vmem:[%s385 + $0x2c0] sm:$0xff]
        %v546 = vld [vmem:[%s385 + $0x2c8] sm:$0xff]
        %v547 = vld [vmem:[%s385 + $0x2d0] sm:$0xff]
        %v548 = vld [vmem:[%s385 + $0x2d8] sm:$0xff]
        %v549 = vld [vmem:[%s385 + $0x2e0] sm:$0xff]
        %v550 = vld [vmem:[%s385 + $0x2e8] sm:$0xff]
        %v551 = vld [vmem:[%s385 + $0x2f0] sm:$0xff]
        %v552 = vld [vmem:[%s385 + $0x2f8] sm:$0xff]
        %v553 = vld [vmem:[%s385 + $0x300] sm:$0xff]
        %v554 = vld [vmem:[%s385 + $0x308] sm:$0xff]
        %v555 = vld [vmem:[%s385 + $0x310] sm:$0xff]
        %v556 = vld [vmem:[%s385 + $0x318] sm:$0xff]
        %v557 = vld [vmem:[%s385 + $0x320] sm:$0xff]
        %v558 = vld [vmem:[%s385 + $0x328] sm:$0xff]
        %v559 = vld [vmem:[%s385 + $0x330] sm:$0xff]
        %v560 = vld [vmem:[%s385 + $0x338] sm:$0xff]
        %v561 = vld [vmem:[%s385 + $0x340] sm:$0xff]
        %v562 = vld [vmem:[%s385 + $0x348] sm:$0xff]
        %v563 = vld [vmem:[%s385 + $0x350] sm:$0xff]
        %v564 = vld [vmem:[%s385 + $0x358] sm:$0xff]
        %v565 = vld [vmem:[%s385 + $0x360] sm:$0xff]
        %v566 = vld [vmem:[%s385 + $0x368] sm:$0xff]
        %v567 = vld [vmem:[%s385 + $0x370] sm:$0xff]
        %v568 = vld [vmem:[%s385 + $0x378] sm:$0xff]
        %v569 = vld [vmem:[%s385 + $0x380] sm:$0xff]
        %v570 = vld [vmem:[%s385 + $0x388] sm:$0xff]
        %v571 = vld [vmem:[%s385 + $0x390] sm:$0xff]
        %v572 = vld [vmem:[%s385 + $0x398] sm:$0xff]
        %v573 = vld [vmem:[%s385 + $0x3a0] sm:$0xff]
        %v574 = vld [vmem:[%s385 + $0x3a8] sm:$0xff]
        %v575 = vld [vmem:[%s385 + $0x3b0] sm:$0xff]
        %v576 = vld [vmem:[%s385 + $0x3b8] sm:$0xff]
        %v577 = vld [vmem:[%s385 + $0x3c0] sm:$0xff]
        %v578 = vld [vmem:[%s385 + $0x3c8] sm:$0xff]
        %v579 = vld [vmem:[%s385 + $0x3d0] sm:$0xff]
        %v580 = vld [vmem:[%s385 + $0x3d8] sm:$0xff]
        %v581 = vld [vmem:[%s385 + $0x3e0] sm:$0xff]
        %v582 = vld [vmem:[%s385 + $0x3e8] sm:$0xff]
        %v583 = vld [vmem:[%s385 + $0x3f0] sm:$0xff]
        %v584 = vld [vmem:[%s385 + $0x3f8] sm:$0xff]
        %v585 = vld [vmem:[%s385 + $0x400] sm:$0xff]
        %v586 = vld [vmem:[%s385 + $0x408] sm:$0xff]
        %v587 = vld [vmem:[%s385 + $0x410] sm:$0xff]
        %v588 = vld [vmem:[%s385 + $0x418] sm:$0xff]
        %v589 = vld [vmem:[%s385 + $0x420] sm:$0xff]
        %v590 = vld [vmem:[%s385 + $0x428] sm:$0xff]
        %v591 = vld [vmem:[%s385 + $0x430] sm:$0xff]
        %v592 = vld [vmem:[%s385 + $0x438] sm:$0xff]
        %v593 = vld [vmem:[%s385 + $0x440] sm:$0xff]
        %v594 = vld [vmem:[%s385 + $0x448] sm:$0xff]
        %v595 = vld [vmem:[%s385 + $0x450] sm:$0xff]
        %v596 = vld [vmem:[%s385 + $0x458] sm:$0xff]
        %v597 = vld [vmem:[%s385 + $0x460] sm:$0xff]
        %v598 = vld [vmem:[%s385 + $0x468] sm:$0xff]
        %v599 = vld [vmem:[%s385 + $0x470] sm:$0xff]
        %v600 = vld [vmem:[%s385 + $0x478] sm:$0xff]
        %v601 = vld [vmem:[%s385 + $0x480] sm:$0xff]
        %v602 = vld [vmem:[%s385 + $0x488] sm:$0xff]
        %v603 = vld [vmem:[%s385 + $0x490] sm:$0xff]
        %v604 = vld [vmem:[%s385 + $0x498] sm:$0xff]
        %v605 = vld [vmem:[%s385 + $0x4a0] sm:$0xff]
        %v606 = vld [vmem:[%s385 + $0x4a8] sm:$0xff]
        %v607 = vld [vmem:[%s385 + $0x4b0] sm:$0xff]
        %v608 = vld [vmem:[%s385 + $0x4b8] sm:$0xff]
        %v609 = vld [vmem:[%s385 + $0x4c0] sm:$0xff]
        %v610 = vld [vmem:[%s385 + $0x4c8] sm:$0xff]
        %v611 = vld [vmem:[%s385 + $0x4d0] sm:$0xff]
        %v612 = vld [vmem:[%s385 + $0x4d8] sm:$0xff]
        %v613 = vld [vmem:[%s385 + $0x4e0] sm:$0xff]
        %v614 = vld [vmem:[%s385 + $0x4e8] sm:$0xff]
        %v615 = vld [vmem:[%s385 + $0x4f0] sm:$0xff]
        %v616 = vld [vmem:[%s385 + $0x4f8] sm:$0xff]
        %v617 = vld [vmem:[%s385 + $0x500] sm:$0xff]
        %v618 = vld [vmem:[%s385 + $0x508] sm:$0xff]
        %v619 = vld [vmem:[%s385 + $0x510] sm:$0xff]
        %v620 = vld [vmem:[%s385 + $0x518] sm:$0xff]
        %v621 = vld [vmem:[%s385 + $0x520] sm:$0xff]
        %v622 = vld [vmem:[%s385 + $0x528] sm:$0xff]
        %v623 = vld [vmem:[%s385 + $0x530] sm:$0xff]
        %v624 = vld [vmem:[%s385 + $0x538] sm:$0xff]
        %v625 = vld [vmem:[%s385 + $0x540] sm:$0xff]
        %v626 = vld [vmem:[%s385 + $0x548] sm:$0xff]
        %v627 = vld [vmem:[%s385 + $0x550] sm:$0xff]
        %v628 = vld [vmem:[%s385 + $0x558] sm:$0xff]
        %v629 = vld [vmem:[%s385 + $0x560] sm:$0xff]
        %v630 = vld [vmem:[%s385 + $0x568] sm:$0xff]
        %v631 = vld [vmem:[%s385 + $0x570] sm:$0xff]
        %v632 = vld [vmem:[%s385 + $0x578] sm:$0xff]
        %v633 = vld [vmem:[%s385 + $0x580] sm:$0xff]
        %v634 = vld [vmem:[%s385 + $0x588] sm:$0xff]
        %v635 = vld [vmem:[%s385 + $0x590] sm:$0xff]
        %v636 = vld [vmem:[%s385 + $0x598] sm:$0xff]
        %v637 = vld [vmem:[%s385 + $0x5a0] sm:$0xff]
        %v638 = vld [vmem:[%s385 + $0x5a8] sm:$0xff]
        %v639 = vld [vmem:[%s385 + $0x5b0] sm:$0xff]
        %v640 = vld [vmem:[%s385 + $0x5b8] sm:$0xff]
        %v641 = vld [vmem:[%s385 + $0x5c0] sm:$0xff]
        %v642 = vld [vmem:[%s385 + $0x5c8] sm:$0xff]
        %v643 = vld [vmem:[%s385 + $0x5d0] sm:$0xff]
        %v644 = vld [vmem:[%s385 + $0x5d8] sm:$0xff]
        %v645 = vld [vmem:[%s385 + $0x5e0] sm:$0xff]
        %v646 = vld [vmem:[%s385 + $0x5e8] sm:$0xff]
        %v647 = vld [vmem:[%s385 + $0x5f0] sm:$0xff]
        %v648 = vld [vmem:[%s385 + $0x5f8] sm:$0xff]
        %v649 = vld [vmem:[%s385 + $0x600] sm:$0xff]
        %v650 = vld [vmem:[%s385 + $0x608] sm:$0xff]
        %v651 = vld [vmem:[%s385 + $0x610] sm:$0xff]
        %v652 = vld [vmem:[%s385 + $0x618] sm:$0xff]
        %v653 = vld [vmem:[%s385 + $0x620] sm:$0xff]
        %v654 = vld [vmem:[%s385 + $0x628] sm:$0xff]
        %v655 = vld [vmem:[%s385 + $0x630] sm:$0xff]
        %v656 = vld [vmem:[%s385 + $0x638] sm:$0xff]
        %v657 = vld [vmem:[%s385 + $0x640] sm:$0xff]
        %v658 = vld [vmem:[%s385 + $0x648] sm:$0xff]
        %v659 = vld [vmem:[%s385 + $0x650] sm:$0xff]
        %v660 = vld [vmem:[%s385 + $0x658] sm:$0xff]
        %v661 = vld [vmem:[%s385 + $0x660] sm:$0xff]
        %v662 = vld [vmem:[%s385 + $0x668] sm:$0xff]
        %v663 = vld [vmem:[%s385 + $0x670] sm:$0xff]
        %v664 = vld [vmem:[%s385 + $0x678] sm:$0xff]
        %v665 = vld [vmem:[%s385 + $0x680] sm:$0xff]
        %v666 = vld [vmem:[%s385 + $0x688] sm:$0xff]
        %v667 = vld [vmem:[%s385 + $0x690] sm:$0xff]
        %v668 = vld [vmem:[%s385 + $0x698] sm:$0xff]
        %v669 = vld [vmem:[%s385 + $0x6a0] sm:$0xff]
        %v670 = vld [vmem:[%s385 + $0x6a8] sm:$0xff]
        %v671 = vld [vmem:[%s385 + $0x6b0] sm:$0xff]
        %v672 = vld [vmem:[%s385 + $0x6b8] sm:$0xff]
        %v673 = vld [vmem:[%s385 + $0x6c0] sm:$0xff]
        %v674 = vld [vmem:[%s385 + $0x6c8] sm:$0xff]
        %v675 = vld [vmem:[%s385 + $0x6d0] sm:$0xff]
        %v676 = vld [vmem:[%s385 + $0x6d8] sm:$0xff]
        %v677 = vld [vmem:[%s385 + $0x6e0] sm:$0xff]
        %v678 = vld [vmem:[%s385 + $0x6e8] sm:$0xff]
        %v679 = vld [vmem:[%s385 + $0x6f0] sm:$0xff]
        %v680 = vld [vmem:[%s385 + $0x6f8] sm:$0xff]
        %v681 = vld [vmem:[%s385 + $0x700] sm:$0xff]
        %v682 = vld [vmem:[%s385 + $0x708] sm:$0xff]
        %v683 = vld [vmem:[%s385 + $0x710] sm:$0xff]
        %v684 = vld [vmem:[%s385 + $0x718] sm:$0xff]
        %v685 = vld [vmem:[%s385 + $0x720] sm:$0xff]
        %v686 = vld [vmem:[%s385 + $0x728] sm:$0xff]
        %v687 = vld [vmem:[%s385 + $0x730] sm:$0xff]
        %v688 = vld [vmem:[%s385 + $0x738] sm:$0xff]
        %v689 = vld [vmem:[%s385 + $0x740] sm:$0xff]
        %v690 = vld [vmem:[%s385 + $0x748] sm:$0xff]
        %v691 = vld [vmem:[%s385 + $0x750] sm:$0xff]
        %v692 = vld [vmem:[%s385 + $0x758] sm:$0xff]
        %v693 = vld [vmem:[%s385 + $0x760] sm:$0xff]
        %v694 = vld [vmem:[%s385 + $0x768] sm:$0xff]
        %v695 = vld [vmem:[%s385 + $0x770] sm:$0xff]
        %v696 = vld [vmem:[%s385 + $0x778] sm:$0xff]
        %v697 = vld [vmem:[%s385 + $0x780] sm:$0xff]
        %v698 = vld [vmem:[%s385 + $0x788] sm:$0xff]
        %v699 = vld [vmem:[%s385 + $0x790] sm:$0xff]
        %v700 = vld [vmem:[%s385 + $0x798] sm:$0xff]
        %v701 = vld [vmem:[%s385 + $0x7a0] sm:$0xff]
        %v702 = vld [vmem:[%s385 + $0x7a8] sm:$0xff]
        %v703 = vld [vmem:[%s385 + $0x7b0] sm:$0xff]
        %v704 = vld [vmem:[%s385 + $0x7b8] sm:$0xff]
        %v705 = vld [vmem:[%s385 + $0x7c0] sm:$0xff]
        %v706 = vld [vmem:[%s385 + $0x7c8] sm:$0xff]
        %v707 = vld [vmem:[%s385 + $0x7d0] sm:$0xff]
        %v708 = vld [vmem:[%s385 + $0x7d8] sm:$0xff]
        %v709 = vld [vmem:[%s385 + $0x7e0] sm:$0xff]
        %v710 = vld [vmem:[%s385 + $0x7e8] sm:$0xff]
        %v711 = vld [vmem:[%s385 + $0x7f0] sm:$0xff]
        %v712 = vld [vmem:[%s385 + $0x7f8] sm:$0xff]
        %v713 = vld [vmem:[%s385 + $0x800] sm:$0xff]
        %v714 = vld [vmem:[%s385 + $0x808] sm:$0xff]
        %v715 = vld [vmem:[%s385 + $0x810] sm:$0xff]
        %v716 = vld [vmem:[%s385 + $0x818] sm:$0xff]
        %v717 = vld [vmem:[%s385 + $0x820] sm:$0xff]
        %v718 = vld [vmem:[%s385 + $0x828] sm:$0xff]
        %v719 = vld [vmem:[%s385 + $0x830] sm:$0xff]
        %v720 = vld [vmem:[%s385 + $0x838] sm:$0xff]
        %v721 = vld [vmem:[%s385 + $0x840] sm:$0xff]
        %v722 = vld [vmem:[%s385 + $0x848] sm:$0xff]
        %v723 = vld [vmem:[%s385 + $0x850] sm:$0xff]
        %v724 = vld [vmem:[%s385 + $0x858] sm:$0xff]
        %v725 = vld [vmem:[%s385 + $0x860] sm:$0xff]
        %v726 = vld [vmem:[%s385 + $0x868] sm:$0xff]
        %v727 = vld [vmem:[%s385 + $0x870] sm:$0xff]
        %v728 = vld [vmem:[%s385 + $0x878] sm:$0xff]
        %v729 = vld [vmem:[%s385 + $0x880] sm:$0xff]
        %v730 = vld [vmem:[%s385 + $0x888] sm:$0xff]
        %v731 = vld [vmem:[%s385 + $0x890] sm:$0xff]
        %v732 = vld [vmem:[%s385 + $0x898] sm:$0xff]
        %v733 = vld [vmem:[%s385 + $0x8a0] sm:$0xff]
        %v734 = vld [vmem:[%s385 + $0x8a8] sm:$0xff]
        %v735 = vld [vmem:[%s385 + $0x8b0] sm:$0xff]
        %v736 = vld [vmem:[%s385 + $0x8b8] sm:$0xff]
        %v737 = vld [vmem:[%s385 + $0x8c0] sm:$0xff]
        %v738 = vld [vmem:[%s385 + $0x8c8] sm:$0xff]
        %v739 = vld [vmem:[%s385 + $0x8d0] sm:$0xff]
        %v740 = vld [vmem:[%s385 + $0x8d8] sm:$0xff]
        %v741 = vld [vmem:[%s385 + $0x8e0] sm:$0xff]
        %v742 = vld [vmem:[%s385 + $0x8e8] sm:$0xff]
        %v743 = vld [vmem:[%s385 + $0x8f0] sm:$0xff]
        %v744 = vld [vmem:[%s385 + $0x8f8] sm:$0xff]
        %v745 = vld [vmem:[%s385 + $0x900] sm:$0xff]
        %v746 = vld [vmem:[%s385 + $0x908] sm:$0xff]
        %v747 = vld [vmem:[%s385 + $0x910] sm:$0xff]
        %v748 = vld [vmem:[%s385 + $0x918] sm:$0xff]
        %v749 = vld [vmem:[%s385 + $0x920] sm:$0xff]
        %v750 = vld [vmem:[%s385 + $0x928] sm:$0xff]
        %v751 = vld [vmem:[%s385 + $0x930] sm:$0xff]
        %v752 = vld [vmem:[%s385 + $0x938] sm:$0xff]
        %v753 = vld [vmem:[%s385 + $0x940] sm:$0xff]
        %v754 = vld [vmem:[%s385 + $0x948] sm:$0xff]
        %v755 = vld [vmem:[%s385 + $0x950] sm:$0xff]
        %v756 = vld [vmem:[%s385 + $0x958] sm:$0xff]
        %v757 = vld [vmem:[%s385 + $0x960] sm:$0xff]
        %v758 = vld [vmem:[%s385 + $0x968] sm:$0xff]
        %v759 = vld [vmem:[%s385 + $0x970] sm:$0xff]
        %v760 = vld [vmem:[%s385 + $0x978] sm:$0xff]
        %v761 = vld [vmem:[%s385 + $0x980] sm:$0xff]
        %v762 = vld [vmem:[%s385 + $0x988] sm:$0xff]
        %v763 = vld [vmem:[%s385 + $0x990] sm:$0xff]
        %v764 = vld [vmem:[%s385 + $0x998] sm:$0xff]
        %v765 = vld [vmem:[%s385 + $0x9a0] sm:$0xff]
        %v766 = vld [vmem:[%s385 + $0x9a8] sm:$0xff]
        %v767 = vld [vmem:[%s385 + $0x9b0] sm:$0xff]
        %v768 = vld [vmem:[%s385 + $0x9b8] sm:$0xff]
        %v769 = vld [vmem:[%s385 + $0x9c0] sm:$0xff]
        %v770 = vld [vmem:[%s385 + $0x9c8] sm:$0xff]
        %v771 = vld [vmem:[%s385 + $0x9d0] sm:$0xff]
        %v772 = vld [vmem:[%s385 + $0x9d8] sm:$0xff]
        %v773 = vld [vmem:[%s385 + $0x9e0] sm:$0xff]
        %v774 = vld [vmem:[%s385 + $0x9e8] sm:$0xff]
        %v775 = vld [vmem:[%s385 + $0x9f0] sm:$0xff]
        %v776 = vld [vmem:[%s385 + $0x9f8] sm:$0xff]
        %v777 = vld [vmem:[%s385 + $0xa00] sm:$0xff]
        %v778 = vld [vmem:[%s385 + $0xa08] sm:$0xff]
        %v779 = vld [vmem:[%s385 + $0xa10] sm:$0xff]
        %v780 = vld [vmem:[%s385 + $0xa18] sm:$0xff]
        %v781 = vld [vmem:[%s385 + $0xa20] sm:$0xff]
        %v782 = vld [vmem:[%s385 + $0xa28] sm:$0xff]
        %v783 = vld [vmem:[%s385 + $0xa30] sm:$0xff]
        %v784 = vld [vmem:[%s385 + $0xa38] sm:$0xff]
        %v785 = vld [vmem:[%s385 + $0xa40] sm:$0xff]
        %v786 = vld [vmem:[%s385 + $0xa48] sm:$0xff]
        %v787 = vld [vmem:[%s385 + $0xa50] sm:$0xff]
        %v788 = vld [vmem:[%s385 + $0xa58] sm:$0xff]
        %v789 = vld [vmem:[%s385 + $0xa60] sm:$0xff]
        %v790 = vld [vmem:[%s385 + $0xa68] sm:$0xff]
        %v791 = vld [vmem:[%s385 + $0xa70] sm:$0xff]
        %v792 = vld [vmem:[%s385 + $0xa78] sm:$0xff]
        %v793 = vld [vmem:[%s385 + $0xa80] sm:$0xff]
        %v794 = vld [vmem:[%s385 + $0xa88] sm:$0xff]
        %v795 = vld [vmem:[%s385 + $0xa90] sm:$0xff]
        %v796 = vld [vmem:[%s385 + $0xa98] sm:$0xff]
        %v797 = vld [vmem:[%s385 + $0xaa0] sm:$0xff]
        %v798 = vld [vmem:[%s385 + $0xaa8] sm:$0xff]
        %v799 = vld [vmem:[%s385 + $0xab0] sm:$0xff]
        %v800 = vld [vmem:[%s385 + $0xab8] sm:$0xff]
        %v801 = vld [vmem:[%s385 + $0xac0] sm:$0xff]
        %v802 = vld [vmem:[%s385 + $0xac8] sm:$0xff]
        %v803 = vld [vmem:[%s385 + $0xad0] sm:$0xff]
        %v804 = vld [vmem:[%s385 + $0xad8] sm:$0xff]
        %v805 = vld [vmem:[%s385 + $0xae0] sm:$0xff]
        %v806 = vld [vmem:[%s385 + $0xae8] sm:$0xff]
        %v807 = vld [vmem:[%s385 + $0xaf0] sm:$0xff]
        %v808 = vld [vmem:[%s385 + $0xaf8] sm:$0xff]
        %v809 = vld [vmem:[%s385 + $0xb00] sm:$0xff]
        %v810 = vld [vmem:[%s385 + $0xb08] sm:$0xff]
        %v811 = vld [vmem:[%s385 + $0xb10] sm:$0xff]
        %v812 = vld [vmem:[%s385 + $0xb18] sm:$0xff]
        %v813 = vld [vmem:[%s385 + $0xb20] sm:$0xff]
        %v814 = vld [vmem:[%s385 + $0xb28] sm:$0xff]
        %v815 = vld [vmem:[%s385 + $0xb30] sm:$0xff]
        %v816 = vld [vmem:[%s385 + $0xb38] sm:$0xff]
        %v817 = vld [vmem:[%s385 + $0xb40] sm:$0xff]
        %v818 = vld [vmem:[%s385 + $0xb48] sm:$0xff]
        %v819 = vld [vmem:[%s385 + $0xb50] sm:$0xff]
        %v820 = vld [vmem:[%s385 + $0xb58] sm:$0xff]
        %v821 = vld [vmem:[%s385 + $0xb60] sm:$0xff]
        %v822 = vld [vmem:[%s385 + $0xb68] sm:$0xff]
        %v823 = vld [vmem:[%s385 + $0xb70] sm:$0xff]
        %v824 = vld [vmem:[%s385 + $0xb78] sm:$0xff]
        %v825 = vld [vmem:[%s385 + $0xb80] sm:$0xff]
        %v826 = vld [vmem:[%s385 + $0xb88] sm:$0xff]
        %v827 = vld [vmem:[%s385 + $0xb90] sm:$0xff]
        %v828 = vld [vmem:[%s385 + $0xb98] sm:$0xff]
        %v829 = vld [vmem:[%s385 + $0xba0] sm:$0xff]
        %v830 = vld [vmem:[%s385 + $0xba8] sm:$0xff]
        %v831 = vld [vmem:[%s385 + $0xbb0] sm:$0xff]
        %v832 = vld [vmem:[%s385 + $0xbb8] sm:$0xff]
        %v833 = vld [vmem:[%s385 + $0xbc0] sm:$0xff]
        %v834 = vld [vmem:[%s385 + $0xbc8] sm:$0xff]
        %v835 = vld [vmem:[%s385 + $0xbd0] sm:$0xff]
        %v836 = vld [vmem:[%s385 + $0xbd8] sm:$0xff]
        %v837 = vld [vmem:[%s385 + $0xbe0] sm:$0xff]
        %v838 = vld [vmem:[%s385 + $0xbe8] sm:$0xff]
        %v839 = vld [vmem:[%s385 + $0xbf0] sm:$0xff]
        %v840 = vld [vmem:[%s385 + $0xbf8] sm:$0xff]
        %v841 = vld [vmem:[%s385 + $0xc00] sm:$0xff]
        %v842 = vld [vmem:[%s385 + $0xc08] sm:$0xff]
        %v843 = vld [vmem:[%s385 + $0xc10] sm:$0xff]
        %v844 = vld [vmem:[%s385 + $0xc18] sm:$0xff]
        %v845 = vld [vmem:[%s385 + $0xc20] sm:$0xff]
        %v846 = vld [vmem:[%s385 + $0xc28] sm:$0xff]
        %v847 = vld [vmem:[%s385 + $0xc30] sm:$0xff]
        %v848 = vld [vmem:[%s385 + $0xc38] sm:$0xff]
        %v849 = vld [vmem:[%s385 + $0xc40] sm:$0xff]
        %v850 = vld [vmem:[%s385 + $0xc48] sm:$0xff]
        %v851 = vld [vmem:[%s385 + $0xc50] sm:$0xff]
        %v852 = vld [vmem:[%s385 + $0xc58] sm:$0xff]
        %v853 = vld [vmem:[%s385 + $0xc60] sm:$0xff]
        %v854 = vld [vmem:[%s385 + $0xc68] sm:$0xff]
        %v855 = vld [vmem:[%s385 + $0xc70] sm:$0xff]
        %v856 = vld [vmem:[%s385 + $0xc78] sm:$0xff]
        %v857 = vmax.f32 %v457, %v459
        %v858 = vmax.f32 %v857, %v461
        %v859 = vmax.f32 %v858, %v463
        %v860 = vmax.f32 %v859, %v465
        %v861 = vmax.f32 %v860, %v467
        %v862 = vmax.f32 %v861, %v469
        %v863 = vmax.f32 %v862, %v471
        %v864 = vmax.f32 %v863, %v473
        %v865 = vmax.f32 %v864, %v475
        %v866 = vmax.f32 %v865, %v477
        %v867 = vmax.f32 %v866, %v479
        %v868 = vmax.f32 %v867, %v481
        %v869 = vmax.f32 %v868, %v483
        %v870 = vmax.f32 %v869, %v485
        %v871 = vmax.f32 %v870, %v487
        %v872 = vmax.f32 %v871, %v489
        %v873 = vmax.f32 %v872, %v491
        %v874 = vmax.f32 %v873, %v493
        %v875 = vmax.f32 %v874, %v495
        %v876 = vmax.f32 %v875, %v497
        %v877 = vmax.f32 %v876, %v499
        %v878 = vmax.f32 %v877, %v501
        %v879 = vmax.f32 %v878, %v503
        %v880 = vmax.f32 %v879, %v505
        %v881 = vrot.slane %v880, 4
        %v882 = vmax.f32 %v880, %v881
        %v883 = vrot.slane %v882, 2
        %v884 = vmax.f32 %v882, %v883
        %v885 = vrot.slane %v884, 1
        %v886 = vmax.f32 %v884, %v885
        %v887 = vmax.f32 %v458, %v460
        %v888 = vmax.f32 %v887, %v462
        %v889 = vmax.f32 %v888, %v464
        %v890 = vmax.f32 %v889, %v466
        %v891 = vmax.f32 %v890, %v468
        %v892 = vmax.f32 %v891, %v470
        %v893 = vmax.f32 %v892, %v472
        %v894 = vmax.f32 %v893, %v474
        %v895 = vmax.f32 %v894, %v476
        %v896 = vmax.f32 %v895, %v478
        %v897 = vmax.f32 %v896, %v480
        %v898 = vmax.f32 %v897, %v482
        %v899 = vmax.f32 %v898, %v484
        %v900 = vmax.f32 %v899, %v486
        %v901 = vmax.f32 %v900, %v488
        %v902 = vmax.f32 %v901, %v490
        %v903 = vmax.f32 %v902, %v492
        %v904 = vmax.f32 %v903, %v494
        %v905 = vmax.f32 %v904, %v496
        %v906 = vmax.f32 %v905, %v498
        %v907 = vmax.f32 %v906, %v500
        %v908 = vmax.f32 %v907, %v502
        %v909 = vmax.f32 %v908, %v504
        %v910 = vmax.f32 %v909, %v506
        %v911 = vrot.slane %v910, 4
        %v912 = vmax.f32 %v910, %v911
        %v913 = vrot.slane %v912, 2
        %v914 = vmax.f32 %v912, %v913
        %v915 = vrot.slane %v914, 1
        %v916 = vmax.f32 %v914, %v915
        %v917 = vmax.f32 %v507, %v509
        %v918 = vmax.f32 %v917, %v511
        %v919 = vmax.f32 %v918, %v513
        %v920 = vmax.f32 %v919, %v515
        %v921 = vmax.f32 %v920, %v517
        %v922 = vmax.f32 %v921, %v519
        %v923 = vmax.f32 %v922, %v521
        %v924 = vmax.f32 %v923, %v523
        %v925 = vmax.f32 %v924, %v525
        %v926 = vmax.f32 %v925, %v527
        %v927 = vmax.f32 %v926, %v529
        %v928 = vmax.f32 %v927, %v531
        %v929 = vmax.f32 %v928, %v533
        %v930 = vmax.f32 %v929, %v535
        %v931 = vmax.f32 %v930, %v537
        %v932 = vmax.f32 %v931, %v539
        %v933 = vmax.f32 %v932, %v541
        %v934 = vmax.f32 %v933, %v543
        %v935 = vmax.f32 %v934, %v545
        %v936 = vmax.f32 %v935, %v547
        %v937 = vmax.f32 %v936, %v549
        %v938 = vmax.f32 %v937, %v551
        %v939 = vmax.f32 %v938, %v553
        %v940 = vmax.f32 %v939, %v555
        %v941 = vrot.slane %v940, 4
        %v942 = vmax.f32 %v940, %v941
        %v943 = vrot.slane %v942, 2
        %v944 = vmax.f32 %v942, %v943
        %v945 = vrot.slane %v944, 1
        %v946 = vmax.f32 %v944, %v945
        %v947 = vmax.f32 %v508, %v510
        %v948 = vmax.f32 %v947, %v512
        %v949 = vmax.f32 %v948, %v514
        %v950 = vmax.f32 %v949, %v516
        %v951 = vmax.f32 %v950, %v518
        %v952 = vmax.f32 %v951, %v520
        %v953 = vmax.f32 %v952, %v522
        %v954 = vmax.f32 %v953, %v524
        %v955 = vmax.f32 %v954, %v526
        %v956 = vmax.f32 %v955, %v528
        %v957 = vmax.f32 %v956, %v530
        %v958 = vmax.f32 %v957, %v532
        %v959 = vmax.f32 %v958, %v534
        %v960 = vmax.f32 %v959, %v536
        %v961 = vmax.f32 %v960, %v538
        %v962 = vmax.f32 %v961, %v540
        %v963 = vmax.f32 %v962, %v542
        %v964 = vmax.f32 %v963, %v544
        %v965 = vmax.f32 %v964, %v546
        %v966 = vmax.f32 %v965, %v548
        %v967 = vmax.f32 %v966, %v550
        %v968 = vmax.f32 %v967, %v552
        %v969 = vmax.f32 %v968, %v554
        %v970 = vmax.f32 %v969, %v556
        %v971 = vrot.slane %v970, 4
        %v972 = vmax.f32 %v970, %v971
        %v973 = vrot.slane %v972, 2
        %v974 = vmax.f32 %v972, %v973
        %v975 = vrot.slane %v974, 1
        %v976 = vmax.f32 %v974, %v975
        %v977 = vmax.f32 %v557, %v559
        %v978 = vmax.f32 %v977, %v561
        %v979 = vmax.f32 %v978, %v563
        %v980 = vmax.f32 %v979, %v565
        %v981 = vmax.f32 %v980, %v567
        %v982 = vmax.f32 %v981, %v569
        %v983 = vmax.f32 %v982, %v571
        %v984 = vmax.f32 %v983, %v573
        %v985 = vmax.f32 %v984, %v575
        %v986 = vmax.f32 %v985, %v577
        %v987 = vmax.f32 %v986, %v579
        %v988 = vmax.f32 %v987, %v581
        %v989 = vmax.f32 %v988, %v583
        %v990 = vmax.f32 %v989, %v585
        %v991 = vmax.f32 %v990, %v587
        %v992 = vmax.f32 %v991, %v589
        %v993 = vmax.f32 %v992, %v591
        %v994 = vmax.f32 %v993, %v593
        %v995 = vmax.f32 %v994, %v595
        %v996 = vmax.f32 %v995, %v597
        %v997 = vmax.f32 %v996, %v599
        %v998 = vmax.f32 %v997, %v601
        %v999 = vmax.f32 %v998, %v603
        %v1000 = vmax.f32 %v999, %v605
        %v1001 = vrot.slane %v1000, 4
        %v1002 = vmax.f32 %v1000, %v1001
        %v1003 = vrot.slane %v1002, 2
        %v1004 = vmax.f32 %v1002, %v1003
        %v1005 = vrot.slane %v1004, 1
        %v1006 = vmax.f32 %v1004, %v1005
        %v1007 = vmax.f32 %v558, %v560
        %v1008 = vmax.f32 %v1007, %v562
        %v1009 = vmax.f32 %v1008, %v564
        %v1010 = vmax.f32 %v1009, %v566
        %v1011 = vmax.f32 %v1010, %v568
        %v1012 = vmax.f32 %v1011, %v570
        %v1013 = vmax.f32 %v1012, %v572
        %v1014 = vmax.f32 %v1013, %v574
        %v1015 = vmax.f32 %v1014, %v576
        %v1016 = vmax.f32 %v1015, %v578
        %v1017 = vmax.f32 %v1016, %v580
        %v1018 = vmax.f32 %v1017, %v582
        %v1019 = vmax.f32 %v1018, %v584
        %v1020 = vmax.f32 %v1019, %v586
        %v1021 = vmax.f32 %v1020, %v588
        %v1022 = vmax.f32 %v1021, %v590
        %v1023 = vmax.f32 %v1022, %v592
        %v1024 = vmax.f32 %v1023, %v594
        %v1025 = vmax.f32 %v1024, %v596
        %v1026 = vmax.f32 %v1025, %v598
        %v1027 = vmax.f32 %v1026, %v600
        %v1028 = vmax.f32 %v1027, %v602
        %v1029 = vmax.f32 %v1028, %v604
        %v1030 = vmax.f32 %v1029, %v606
        %v1031 = vrot.slane %v1030, 4
        %v1032 = vmax.f32 %v1030, %v1031
        %v1033 = vrot.slane %v1032, 2
        %v1034 = vmax.f32 %v1032, %v1033
        %v1035 = vrot.slane %v1034, 1
        %v1036 = vmax.f32 %v1034, %v1035
        %v1037 = vmax.f32 %v607, %v609
        %v1038 = vmax.f32 %v1037, %v611
        %v1039 = vmax.f32 %v1038, %v613
        %v1040 = vmax.f32 %v1039, %v615
        %v1041 = vmax.f32 %v1040, %v617
        %v1042 = vmax.f32 %v1041, %v619
        %v1043 = vmax.f32 %v1042, %v621
        %v1044 = vmax.f32 %v1043, %v623
        %v1045 = vmax.f32 %v1044, %v625
        %v1046 = vmax.f32 %v1045, %v627
        %v1047 = vmax.f32 %v1046, %v629
        %v1048 = vmax.f32 %v1047, %v631
        %v1049 = vmax.f32 %v1048, %v633
        %v1050 = vmax.f32 %v1049, %v635
        %v1051 = vmax.f32 %v1050, %v637
        %v1052 = vmax.f32 %v1051, %v639
        %v1053 = vmax.f32 %v1052, %v641
        %v1054 = vmax.f32 %v1053, %v643
        %v1055 = vmax.f32 %v1054, %v645
        %v1056 = vmax.f32 %v1055, %v647
        %v1057 = vmax.f32 %v1056, %v649
        %v1058 = vmax.f32 %v1057, %v651
        %v1059 = vmax.f32 %v1058, %v653
        %v1060 = vmax.f32 %v1059, %v655
        %v1061 = vrot.slane %v1060, 4
        %v1062 = vmax.f32 %v1060, %v1061
        %v1063 = vrot.slane %v1062, 2
        %v1064 = vmax.f32 %v1062, %v1063
        %v1065 = vrot.slane %v1064, 1
        %v1066 = vmax.f32 %v1064, %v1065
        %v1067 = vmax.f32 %v608, %v610
        %v1068 = vmax.f32 %v1067, %v612
        %v1069 = vmax.f32 %v1068, %v614
        %v1070 = vmax.f32 %v1069, %v616
        %v1071 = vmax.f32 %v1070, %v618
        %v1072 = vmax.f32 %v1071, %v620
        %v1073 = vmax.f32 %v1072, %v622
        %v1074 = vmax.f32 %v1073, %v624
        %v1075 = vmax.f32 %v1074, %v626
        %v1076 = vmax.f32 %v1075, %v628
        %v1077 = vmax.f32 %v1076, %v630
        %v1078 = vmax.f32 %v1077, %v632
        %v1079 = vmax.f32 %v1078, %v634
        %v1080 = vmax.f32 %v1079, %v636
        %v1081 = vmax.f32 %v1080, %v638
        %v1082 = vmax.f32 %v1081, %v640
        %v1083 = vmax.f32 %v1082, %v642
        %v1084 = vmax.f32 %v1083, %v644
        %v1085 = vmax.f32 %v1084, %v646
        %v1086 = vmax.f32 %v1085, %v648
        %v1087 = vmax.f32 %v1086, %v650
        %v1088 = vmax.f32 %v1087, %v652
        %v1089 = vmax.f32 %v1088, %v654
        %v1090 = vmax.f32 %v1089, %v656
        %v1091 = vrot.slane %v1090, 4
        %v1092 = vmax.f32 %v1090, %v1091
        %v1093 = vrot.slane %v1092, 2
        %v1094 = vmax.f32 %v1092, %v1093
        %v1095 = vrot.slane %v1094, 1
        %v1096 = vmax.f32 %v1094, %v1095
        %v1097 = vmax.f32 %v657, %v659
        %v1098 = vmax.f32 %v1097, %v661
        %v1099 = vmax.f32 %v1098, %v663
        %v1100 = vmax.f32 %v1099, %v665
        %v1101 = vmax.f32 %v1100, %v667
        %v1102 = vmax.f32 %v1101, %v669
        %v1103 = vmax.f32 %v1102, %v671
        %v1104 = vmax.f32 %v1103, %v673
        %v1105 = vmax.f32 %v1104, %v675
        %v1106 = vmax.f32 %v1105, %v677
        %v1107 = vmax.f32 %v1106, %v679
        %v1108 = vmax.f32 %v1107, %v681
        %v1109 = vmax.f32 %v1108, %v683
        %v1110 = vmax.f32 %v1109, %v685
        %v1111 = vmax.f32 %v1110, %v687
        %v1112 = vmax.f32 %v1111, %v689
        %v1113 = vmax.f32 %v1112, %v691
        %v1114 = vmax.f32 %v1113, %v693
        %v1115 = vmax.f32 %v1114, %v695
        %v1116 = vmax.f32 %v1115, %v697
        %v1117 = vmax.f32 %v1116, %v699
        %v1118 = vmax.f32 %v1117, %v701
        %v1119 = vmax.f32 %v1118, %v703
        %v1120 = vmax.f32 %v1119, %v705
        %v1121 = vrot.slane %v1120, 4
        %v1122 = vmax.f32 %v1120, %v1121
        %v1123 = vrot.slane %v1122, 2
        %v1124 = vmax.f32 %v1122, %v1123
        %v1125 = vrot.slane %v1124, 1
        %v1126 = vmax.f32 %v1124, %v1125
        %v1127 = vmax.f32 %v658, %v660
        %v1128 = vmax.f32 %v1127, %v662
        %v1129 = vmax.f32 %v1128, %v664
        %v1130 = vmax.f32 %v1129, %v666
        %v1131 = vmax.f32 %v1130, %v668
        %v1132 = vmax.f32 %v1131, %v670
        %v1133 = vmax.f32 %v1132, %v672
        %v1134 = vmax.f32 %v1133, %v674
        %v1135 = vmax.f32 %v1134, %v676
        %v1136 = vmax.f32 %v1135, %v678
        %v1137 = vmax.f32 %v1136, %v680
        %v1138 = vmax.f32 %v1137, %v682
        %v1139 = vmax.f32 %v1138, %v684
        %v1140 = vmax.f32 %v1139, %v686
        %v1141 = vmax.f32 %v1140, %v688
        %v1142 = vmax.f32 %v1141, %v690
        %v1143 = vmax.f32 %v1142, %v692
        %v1144 = vmax.f32 %v1143, %v694
        %v1145 = vmax.f32 %v1144, %v696
        %v1146 = vmax.f32 %v1145, %v698
        %v1147 = vmax.f32 %v1146, %v700
        %v1148 = vmax.f32 %v1147, %v702
        %v1149 = vmax.f32 %v1148, %v704
        %v1150 = vmax.f32 %v1149, %v706
        %v1151 = vrot.slane %v1150, 4
        %v1152 = vmax.f32 %v1150, %v1151
        %v1153 = vrot.slane %v1152, 2
        %v1154 = vmax.f32 %v1152, %v1153
        %v1155 = vrot.slane %v1154, 1
        %v1156 = vmax.f32 %v1154, %v1155
        %v1157 = vmax.f32 %v707, %v709
        %v1158 = vmax.f32 %v1157, %v711
        %v1159 = vmax.f32 %v1158, %v713
        %v1160 = vmax.f32 %v1159, %v715
        %v1161 = vmax.f32 %v1160, %v717
        %v1162 = vmax.f32 %v1161, %v719
        %v1163 = vmax.f32 %v1162, %v721
        %v1164 = vmax.f32 %v1163, %v723
        %v1165 = vmax.f32 %v1164, %v725
        %v1166 = vmax.f32 %v1165, %v727
        %v1167 = vmax.f32 %v1166, %v729
        %v1168 = vmax.f32 %v1167, %v731
        %v1169 = vmax.f32 %v1168, %v733
        %v1170 = vmax.f32 %v1169, %v735
        %v1171 = vmax.f32 %v1170, %v737
        %v1172 = vmax.f32 %v1171, %v739
        %v1173 = vmax.f32 %v1172, %v741
        %v1174 = vmax.f32 %v1173, %v743
        %v1175 = vmax.f32 %v1174, %v745
        %v1176 = vmax.f32 %v1175, %v747
        %v1177 = vmax.f32 %v1176, %v749
        %v1178 = vmax.f32 %v1177, %v751
        %v1179 = vmax.f32 %v1178, %v753
        %v1180 = vmax.f32 %v1179, %v755
        %v1181 = vrot.slane %v1180, 4
        %v1182 = vmax.f32 %v1180, %v1181
        %v1183 = vrot.slane %v1182, 2
        %v1184 = vmax.f32 %v1182, %v1183
        %v1185 = vrot.slane %v1184, 1
        %v1186 = vmax.f32 %v1184, %v1185
        %v1187 = vmax.f32 %v708, %v710
        %v1188 = vmax.f32 %v1187, %v712
        %v1189 = vmax.f32 %v1188, %v714
        %v1190 = vmax.f32 %v1189, %v716
        %v1191 = vmax.f32 %v1190, %v718
        %v1192 = vmax.f32 %v1191, %v720
        %v1193 = vmax.f32 %v1192, %v722
        %v1194 = vmax.f32 %v1193, %v724
        %v1195 = vmax.f32 %v1194, %v726
        %v1196 = vmax.f32 %v1195, %v728
        %v1197 = vmax.f32 %v1196, %v730
        %v1198 = vmax.f32 %v1197, %v732
        %v1199 = vmax.f32 %v1198, %v734
        %v1200 = vmax.f32 %v1199, %v736
        %v1201 = vmax.f32 %v1200, %v738
        %v1202 = vmax.f32 %v1201, %v740
        %v1203 = vmax.f32 %v1202, %v742
        %v1204 = vmax.f32 %v1203, %v744
        %v1205 = vmax.f32 %v1204, %v746
        %v1206 = vmax.f32 %v1205, %v748
        %v1207 = vmax.f32 %v1206, %v750
        %v1208 = vmax.f32 %v1207, %v752
        %v1209 = vmax.f32 %v1208, %v754
        %v1210 = vmax.f32 %v1209, %v756
        %v1211 = vrot.slane %v1210, 4
        %v1212 = vmax.f32 %v1210, %v1211
        %v1213 = vrot.slane %v1212, 2
        %v1214 = vmax.f32 %v1212, %v1213
        %v1215 = vrot.slane %v1214, 1
        %v1216 = vmax.f32 %v1214, %v1215
        %v1217 = vmax.f32 %v757, %v759
        %v1218 = vmax.f32 %v1217, %v761
        %v1219 = vmax.f32 %v1218, %v763
        %v1220 = vmax.f32 %v1219, %v765
        %v1221 = vmax.f32 %v1220, %v767
        %v1222 = vmax.f32 %v1221, %v769
        %v1223 = vmax.f32 %v1222, %v771
        %v1224 = vmax.f32 %v1223, %v773
        %v1225 = vmax.f32 %v1224, %v775
        %v1226 = vmax.f32 %v1225, %v777
        %v1227 = vmax.f32 %v1226, %v779
        %v1228 = vmax.f32 %v1227, %v781
        %v1229 = vmax.f32 %v1228, %v783
        %v1230 = vmax.f32 %v1229, %v785
        %v1231 = vmax.f32 %v1230, %v787
        %v1232 = vmax.f32 %v1231, %v789
        %v1233 = vmax.f32 %v1232, %v791
        %v1234 = vmax.f32 %v1233, %v793
        %v1235 = vmax.f32 %v1234, %v795
        %v1236 = vmax.f32 %v1235, %v797
        %v1237 = vmax.f32 %v1236, %v799
        %v1238 = vmax.f32 %v1237, %v801
        %v1239 = vmax.f32 %v1238, %v803
        %v1240 = vmax.f32 %v1239, %v805
        %v1241 = vrot.slane %v1240, 4
        %v1242 = vmax.f32 %v1240, %v1241
        %v1243 = vrot.slane %v1242, 2
        %v1244 = vmax.f32 %v1242, %v1243
        %v1245 = vrot.slane %v1244, 1
        %v1246 = vmax.f32 %v1244, %v1245
        %v1247 = vmax.f32 %v758, %v760
        %v1248 = vmax.f32 %v1247, %v762
        %v1249 = vmax.f32 %v1248, %v764
        %v1250 = vmax.f32 %v1249, %v766
        %v1251 = vmax.f32 %v1250, %v768
        %v1252 = vmax.f32 %v1251, %v770
        %v1253 = vmax.f32 %v1252, %v772
        %v1254 = vmax.f32 %v1253, %v774
        %v1255 = vmax.f32 %v1254, %v776
        %v1256 = vmax.f32 %v1255, %v778
        %v1257 = vmax.f32 %v1256, %v780
        %v1258 = vmax.f32 %v1257, %v782
        %v1259 = vmax.f32 %v1258, %v784
        %v1260 = vmax.f32 %v1259, %v786
        %v1261 = vmax.f32 %v1260, %v788
        %v1262 = vmax.f32 %v1261, %v790
        %v1263 = vmax.f32 %v1262, %v792
        %v1264 = vmax.f32 %v1263, %v794
        %v1265 = vmax.f32 %v1264, %v796
        %v1266 = vmax.f32 %v1265, %v798
        %v1267 = vmax.f32 %v1266, %v800
        %v1268 = vmax.f32 %v1267, %v802
        %v1269 = vmax.f32 %v1268, %v804
        %v1270 = vmax.f32 %v1269, %v806
        %v1271 = vrot.slane %v1270, 4
        %v1272 = vmax.f32 %v1270, %v1271
        %v1273 = vrot.slane %v1272, 2
        %v1274 = vmax.f32 %v1272, %v1273
        %v1275 = vrot.slane %v1274, 1
        %v1276 = vmax.f32 %v1274, %v1275
        %v1277 = vmax.f32 %v807, %v809
        %v1278 = vmax.f32 %v1277, %v811
        %v1279 = vmax.f32 %v1278, %v813
        %v1280 = vmax.f32 %v1279, %v815
        %v1281 = vmax.f32 %v1280, %v817
        %v1282 = vmax.f32 %v1281, %v819
        %v1283 = vmax.f32 %v1282, %v821
        %v1284 = vmax.f32 %v1283, %v823
        %v1285 = vmax.f32 %v1284, %v825
        %v1286 = vmax.f32 %v1285, %v827
        %v1287 = vmax.f32 %v1286, %v829
        %v1288 = vmax.f32 %v1287, %v831
        %v1289 = vmax.f32 %v1288, %v833
        %v1290 = vmax.f32 %v1289, %v835
        %v1291 = vmax.f32 %v1290, %v837
        %v1292 = vmax.f32 %v1291, %v839
        %v1293 = vmax.f32 %v1292, %v841
        %v1294 = vmax.f32 %v1293, %v843
        %v1295 = vmax.f32 %v1294, %v845
        %v1296 = vmax.f32 %v1295, %v847
        %v1297 = vmax.f32 %v1296, %v849
        %v1298 = vmax.f32 %v1297, %v851
        %v1299 = vmax.f32 %v1298, %v853
        %v1300 = vmax.f32 %v1299, %v855
        %v1301 = vrot.slane %v1300, 4
        %v1302 = vmax.f32 %v1300, %v1301
        %v1303 = vrot.slane %v1302, 2
        %v1304 = vmax.f32 %v1302, %v1303
        %v1305 = vrot.slane %v1304, 1
        %v1306 = vmax.f32 %v1304, %v1305
        %v1307 = vmax.f32 %v808, %v810
        %v1308 = vmax.f32 %v1307, %v812
        %v1309 = vmax.f32 %v1308, %v814
        %v1310 = vmax.f32 %v1309, %v816
        %v1311 = vmax.f32 %v1310, %v818
        %v1312 = vmax.f32 %v1311, %v820
        %v1313 = vmax.f32 %v1312, %v822
        %v1314 = vmax.f32 %v1313, %v824
        %v1315 = vmax.f32 %v1314, %v826
        %v1316 = vmax.f32 %v1315, %v828
        %v1317 = vmax.f32 %v1316, %v830
        %v1318 = vmax.f32 %v1317, %v832
        %v1319 = vmax.f32 %v1318, %v834
        %v1320 = vmax.f32 %v1319, %v836
        %v1321 = vmax.f32 %v1320, %v838
        %v1322 = vmax.f32 %v1321, %v840
        %v1323 = vmax.f32 %v1322, %v842
        %v1324 = vmax.f32 %v1323, %v844
        %v1325 = vmax.f32 %v1324, %v846
        %v1326 = vmax.f32 %v1325, %v848
        %v1327 = vmax.f32 %v1326, %v850
        %v1328 = vmax.f32 %v1327, %v852
        %v1329 = vmax.f32 %v1328, %v854
        %v1330 = vmax.f32 %v1329, %v856
        %v1331 = vrot.slane %v1330, 4
        %v1332 = vmax.f32 %v1330, %v1331
        %v1333 = vrot.slane %v1332, 2
        %v1334 = vmax.f32 %v1332, %v1333
        %v1335 = vrot.slane %v1334, 1
        %v1336 = vmax.f32 %v1334, %v1335
        %v1337 = vld [vmem:[#allocation2] sm:$0xff]
        %v1338 = vld [vmem:[#allocation2 + $0x8] sm:$0xff]
        %vm1355 = vcmask 1041409
        %v1356 = vsel %vm1355, %v946, %v886
        %vm1357 = vcmask 1042434
        %v1358 = vsel %vm1357, %v1006, %v1356
        %vm1359 = vcmask 1043459
        %v1360 = vsel %vm1359, %v1066, %v1358
        %vm1361 = vcmask 1044484
        %v1362 = vsel %vm1361, %v1126, %v1360
        %vm1363 = vcmask 1045509
        %v1364 = vsel %vm1363, %v1186, %v1362
        %vm1365 = vcmask 1046534
        %v1366 = vsel %vm1365, %v1246, %v1364
        %vm1367 = vcmask 1047559
        %v1368 = vsel %vm1367, %v1306, %v1366
        %v1369 = vsel %vm1355, %v976, %v916
        %v1370 = vsel %vm1357, %v1036, %v1369
        %v1371 = vsel %vm1359, %v1096, %v1370
        %v1372 = vsel %vm1361, %v1156, %v1371
        %v1373 = vsel %vm1363, %v1216, %v1372
        %v1374 = vsel %vm1365, %v1276, %v1373
        %v1375 = vsel %vm1367, %v1336, %v1374
        %v1378 = vmax.f32 %v1337, %v1368
        %v1379 = vmax.f32 %v1338, %v1375
        %1380 = vst [vmem:[#allocation2] sm:$0xff] %v1378
        %1381 = vst [vmem:[#allocation2 + $0x8] sm:$0xff] %v1379
        // Predicated region
        $region85: #{tpu_custom_call.1} parent=55 // pred_check
          %p1382 = pneg %p451
        $region86: #{tpu_custom_call.1} parent=55 // pred_check_branch
          %1384 = sbr.rel (%p1382) target = $region88
        $region87: #{tpu_custom_call.1} parent=55 // pred_region
          %v1385 = vld [vmem:[#allocation2] sm:$0xff]
          %v1386 = vld [vmem:[#allocation2 + $0x8] sm:$0xff]
          %v1387 = vld [vmem:[#allocation5] sm:$0xff]
          %v1388 = vld [vmem:[#allocation5 + $0x8] sm:$0xff]
          %v1389 = vld [vmem:[#allocation5 + $0x10] sm:$0xff]
          %v1390 = vld [vmem:[#allocation5 + $0x18] sm:$0xff]
          %v1391 = vld [vmem:[#allocation5 + $0x20] sm:$0xff]
          %v1392 = vld [vmem:[#allocation5 + $0x28] sm:$0xff]
          %v1393 = vld [vmem:[#allocation5 + $0x30] sm:$0xff]
          %v1394 = vld [vmem:[#allocation5 + $0x38] sm:$0xff]
          %v1395 = vld [vmem:[#allocation5 + $0x40] sm:$0xff]
          %v1396 = vld [vmem:[#allocation5 + $0x48] sm:$0xff]
          %v1397 = vld [vmem:[#allocation5 + $0x50] sm:$0xff]
          %v1398 = vld [vmem:[#allocation5 + $0x58] sm:$0xff]
          %v1399 = vld [vmem:[#allocation5 + $0x60] sm:$0xff]
          %v1400 = vld [vmem:[#allocation5 + $0x68] sm:$0xff]
          %v1401 = vld [vmem:[#allocation5 + $0x70] sm:$0xff]
          %v1402 = vld [vmem:[#allocation5 + $0x78] sm:$0xff]
          %v1403 = vld [vmem:[#allocation5 + $0x80] sm:$0xff]
          %v1404 = vld [vmem:[#allocation5 + $0x88] sm:$0xff]
          %v1405 = vld [vmem:[#allocation5 + $0x90] sm:$0xff]
          %v1406 = vld [vmem:[#allocation5 + $0x98] sm:$0xff]
          %v1407 = vld [vmem:[#allocation5 + $0xa0] sm:$0xff]
          %v1408 = vld [vmem:[#allocation5 + $0xa8] sm:$0xff]
          %v1409 = vld [vmem:[#allocation5 + $0xb0] sm:$0xff]
          %v1410 = vld [vmem:[#allocation5 + $0xb8] sm:$0xff]
          %v1411 = vld [vmem:[#allocation5 + $0xc0] sm:$0xff]
          %v1412 = vld [vmem:[#allocation5 + $0xc8] sm:$0xff]
          %v1413 = vld [vmem:[#allocation5 + $0xd0] sm:$0xff]
          %v1414 = vld [vmem:[#allocation5 + $0xd8] sm:$0xff]
          %v1415 = vld [vmem:[#allocation5 + $0xe0] sm:$0xff]
          %v1416 = vld [vmem:[#allocation5 + $0xe8] sm:$0xff]
          %v1417 = vld [vmem:[#allocation5 + $0xf0] sm:$0xff]
          %v1418 = vld [vmem:[#allocation5 + $0xf8] sm:$0xff]
          %v1419 = vld [vmem:[#allocation7] sm:$0x1]
          %v1421 = vlaneseq
          %v1422 = vshrl.u32 %v1421, 7
          %v1423 = vsub.s32 0, %v1422
          %v1424 = vrot.slane %v1419, %v1423
          %1426 = vmatprep.subr.mxu0 0.0
          %1427 = vmatpush1.msra.mxu0 %v1387
          %1428 = vmatprep.subr.mxu0 0.0
          %1429 = vmatpush1.msra.mxu0 %v1388
          %1430 = vmatprep.subr.mxu0 0.0
          %1431 = vmatpush1.msra.mxu0 %v1389
          %1432 = vmatprep.subr.mxu0 0.0
          %1433 = vmatpush1.msra.mxu0 %v1390
          %1434 = vmatprep.subr.mxu0 0.0
          %1435 = vmatpush1.msra.mxu0 %v1391
          %1436 = vmatprep.subr.mxu0 0.0
          %1437 = vmatpush1.msra.mxu0 %v1392
          %1438 = vmatprep.subr.mxu0 0.0
          %1439 = vmatpush1.msra.mxu0 %v1393
          %1440 = vmatprep.subr.mxu0 0.0
          %1441 = vmatpush1.msra.mxu0 %v1394
          %1442 = vmatprep.subr.mxu0 0.0
          %1443 = vmatpush1.msra.mxu0 %v1395
          %1444 = vmatprep.subr.mxu0 0.0
          %1445 = vmatpush1.msra.mxu0 %v1396
          %1446 = vmatprep.subr.mxu0 0.0
          %1447 = vmatpush1.msra.mxu0 %v1397
          %1448 = vmatprep.subr.mxu0 0.0
          %1449 = vmatpush1.msra.mxu0 %v1398
          %1450 = vmatprep.subr.mxu0 0.0
          %1451 = vmatpush1.msra.mxu0 %v1399
          %1452 = vmatprep.subr.mxu0 0.0
          %1453 = vmatpush1.msra.mxu0 %v1400
          %1454 = vmatprep.subr.mxu0 0.0
          %1455 = vmatpush1.msra.mxu0 %v1401
          %1456 = vmatprep.subr.mxu0 0.0
          %1457 = vmatpush1.msra.mxu0 %v1402
          %1458 = vmatprep.subr.mxu0 0.0
          %1459 = vmatpush1.msra.mxu0 %v1403
          %1460 = vmatprep.subr.mxu0 0.0
          %1461 = vmatpush1.msra.mxu0 %v1404
          %1462 = vmatprep.subr.mxu0 0.0
          %1463 = vmatpush1.msra.mxu0 %v1405
          %1464 = vmatprep.subr.mxu0 0.0
          %1465 = vmatpush1.msra.mxu0 %v1406
          %1466 = vmatprep.subr.mxu0 0.0
          %1467 = vmatpush1.msra.mxu0 %v1407
          %1468 = vmatprep.subr.mxu0 0.0
          %1469 = vmatpush1.msra.mxu0 %v1408
          %1470 = vmatprep.subr.mxu0 0.0
          %1471 = vmatpush1.msra.mxu0 %v1409
          %1472 = vmatprep.subr.mxu0 0.0
          %1473 = vmatpush1.msra.mxu0 %v1410
          %1474 = vmatprep.subr.mxu0 0.0
          %1475 = vmatpush1.msra.mxu0 %v1411
          %1476 = vmatprep.subr.mxu0 0.0
          %1477 = vmatpush1.msra.mxu0 %v1412
          %1478 = vmatprep.subr.mxu0 0.0
          %1479 = vmatpush1.msra.mxu0 %v1413
          %1480 = vmatprep.subr.mxu0 0.0
          %1481 = vmatpush1.msra.mxu0 %v1414
          %1482 = vmatprep.subr.mxu0 0.0
          %1483 = vmatpush1.msra.mxu0 %v1415
          %1484 = vmatprep.subr.mxu0 0.0
          %1485 = vmatpush1.msra.mxu0 %v1416
          %1486 = vmatprep.subr.mxu0 0.0
          %1487 = vmatpush1.msra.mxu0 %v1417
          %1488 = vmatprep.subr.mxu0 0.0
          %1489 = vmatpush1.msra.mxu0 %v1418
          %1490 = vmatprep.mubr.f32.mxu0 %v1386
          %1491 = vmatmul.mubr.f32.gmra.mrb[0].mxu0 %v1385
          %v1492 = vpop.f32.mrb[0].mxu0
          %v1493 = vadd.f32 %v1424, %v1492
          %v1494 = vpop.f32.mrb[0].mxu0
          %1495 = vdwg.mxu0
          %v1496 = vmax.f32 %v1493, 0.0
          %v1497 = vld [vmem:[%s3] sm:$0xff]
          %v1498 = vld [vmem:[%s3 + $0x8] sm:$0xff]
          %v1499 = vld [vmem:[%s3 + $0x10] sm:$0xff]
          %v1500 = vld [vmem:[%s3 + $0x18] sm:$0xff]
          %v1501 = vld [vmem:[%s3 + $0x20] sm:$0xff]
          %v1502 = vld [vmem:[%s3 + $0x28] sm:$0xff]
          %v1503 = vld [vmem:[%s3 + $0x30] sm:$0xff]
          %v1504 = vld [vmem:[%s3 + $0x38] sm:$0xff]
          %v1505 = vld [vmem:[%s3 + $0x40] sm:$0xff]
          %v1506 = vld [vmem:[%s3 + $0x48] sm:$0xff]
          %v1507 = vld [vmem:[%s3 + $0x50] sm:$0xff]
          %v1508 = vld [vmem:[%s3 + $0x58] sm:$0xff]
          %v1509 = vld [vmem:[%s3 + $0x60] sm:$0xff]
          %v1510 = vld [vmem:[%s3 + $0x68] sm:$0xff]
          %v1511 = vld [vmem:[%s3 + $0x70] sm:$0xff]
          %v1512 = vld [vmem:[%s3 + $0x78] sm:$0xff]
          %v1513 = vld [vmem:[#allocation8] sm:$0x1]
          %v1515 = vlaneseq
          %v1516 = vshrl.u32 %v1515, 7
          %v1517 = vsub.s32 0, %v1516
          %v1518 = vrot.slane %v1513, %v1517
          %1520 = vmatprep.subr.mxu0 0.0
          %1521 = vmatpush1.msra.mxu0 %v1497
          %1522 = vmatprep.subr.mxu0 0.0
          %1523 = vmatpush1.msra.mxu0 %v1498
          %1524 = vmatprep.subr.mxu0 0.0
          %1525 = vmatpush1.msra.mxu0 %v1499
          %1526 = vmatprep.subr.mxu0 0.0
          %1527 = vmatpush1.msra.mxu0 %v1500
          %1528 = vmatprep.subr.mxu0 0.0
          %1529 = vmatpush1.msra.mxu0 %v1501
          %1530 = vmatprep.subr.mxu0 0.0
          %1531 = vmatpush1.msra.mxu0 %v1502
          %1532 = vmatprep.subr.mxu0 0.0
          %1533 = vmatpush1.msra.mxu0 %v1503
          %1534 = vmatprep.subr.mxu0 0.0
          %1535 = vmatpush1.msra.mxu0 %v1504
          %1536 = vmatprep.subr.mxu0 0.0
          %1537 = vmatpush1.msra.mxu0 %v1505
          %1538 = vmatprep.subr.mxu0 0.0
          %1539 = vmatpush1.msra.mxu0 %v1506
          %1540 = vmatprep.subr.mxu0 0.0
          %1541 = vmatpush1.msra.mxu0 %v1507
          %1542 = vmatprep.subr.mxu0 0.0
          %1543 = vmatpush1.msra.mxu0 %v1508
          %1544 = vmatprep.subr.mxu0 0.0
          %1545 = vmatpush1.msra.mxu0 %v1509
          %1546 = vmatprep.subr.mxu0 0.0
          %1547 = vmatpush1.msra.mxu0 %v1510
          %1548 = vmatprep.subr.mxu0 0.0
          %1549 = vmatpush1.msra.mxu0 %v1511
          %1550 = vmatprep.subr.mxu0 0.0
          %1551 = vmatpush1.msra.mxu0 %v1512
          %1552 = vmatprep.subr.mxu0 0.0
          %1553 = vmatpush1.msra.mxu0 0.0
          %1554 = vmatprep.subr.mxu0 0.0
          %1555 = vmatpush1.msra.mxu0 0.0
          %1556 = vmatprep.subr.mxu0 0.0
          %1557 = vmatpush1.msra.mxu0 0.0
          %1558 = vmatprep.subr.mxu0 0.0
          %1559 = vmatpush1.msra.mxu0 0.0
          %1560 = vmatprep.subr.mxu0 0.0
          %1561 = vmatpush1.msra.mxu0 0.0
          %1562 = vmatprep.subr.mxu0 0.0
          %1563 = vmatpush1.msra.mxu0 0.0
          %1564 = vmatprep.subr.mxu0 0.0
          %1565 = vmatpush1.msra.mxu0 0.0
          %1566 = vmatprep.subr.mxu0 0.0
          %1567 = vmatpush1.msra.mxu0 0.0
          %1568 = vmatprep.subr.mxu0 0.0
          %1569 = vmatpush1.msra.mxu0 0.0
          %1570 = vmatprep.subr.mxu0 0.0
          %1571 = vmatpush1.msra.mxu0 0.0
          %1572 = vmatprep.subr.mxu0 0.0
          %1573 = vmatpush1.msra.mxu0 0.0
          %1574 = vmatprep.subr.mxu0 0.0
          %1575 = vmatpush1.msra.mxu0 0.0
          %1576 = vmatprep.subr.mxu0 0.0
          %1577 = vmatpush1.msra.mxu0 0.0
          %1578 = vmatprep.subr.mxu0 0.0
          %1579 = vmatpush1.msra.mxu0 0.0
          %1580 = vmatprep.subr.mxu0 0.0
          %1581 = vmatpush1.msra.mxu0 0.0
          %1582 = vmatprep.subr.mxu0 0.0
          %1583 = vmatpush1.msra.mxu0 0.0
          %1584 = vmatprep.mubr.f32.mxu0 0.0
          %1585 = vmatmul.mubr.f32.gmra.mrb[0].mxu0 %v1496
          %v1586 = vpop.f32.mrb[0].mxu0
          %v1587 = vadd.f32 %v1518, %v1586
          %v1588 = vpop.f32.mrb[0].mxu0
          %1589 = vdwg.mxu0
          %v1590 = vmax.f32 %v1587, 0.0
          %v1591 = vld [vmem:[%s5] sm:$0xff]
          %v1592 = vld [vmem:[%s5 + $0x8] sm:$0xff]
          %v1593 = vld [vmem:[%s5 + $0x10] sm:$0xff]
          %v1594 = vld [vmem:[%s5 + $0x18] sm:$0xff]
          %v1595 = vld [vmem:[%s5 + $0x20] sm:$0xff]
          %v1596 = vld [vmem:[%s5 + $0x28] sm:$0xff]
          %v1597 = vld [vmem:[%s5 + $0x30] sm:$0xff]
          %v1598 = vld [vmem:[%s5 + $0x38] sm:$0xff]
          %v1599 = vld [vmem:[#allocation10] sm:$0x1]
          %v1601 = vlaneseq
          %v1602 = vshrl.u32 %v1601, 7
          %v1603 = vsub.s32 0, %v1602
          %v1604 = vrot.slane %v1599, %v1603
          %vm1606 = vcmask 523264
          %v1608 = vsel %vm1606, %v1590, 0
          %1610 = vmatprep.subr.mxu0 0.0
          %1611 = vmatpush1.msra.mxu0 %v1591
          %1612 = vmatprep.subr.mxu0 0.0
          %1613 = vmatpush1.msra.mxu0 %v1592
          %1614 = vmatprep.subr.mxu0 0.0
          %1615 = vmatpush1.msra.mxu0 %v1593
          %1616 = vmatprep.subr.mxu0 0.0
          %1617 = vmatpush1.msra.mxu0 %v1594
          %1618 = vmatprep.subr.mxu0 0.0
          %1619 = vmatpush1.msra.mxu0 %v1595
          %1620 = vmatprep.subr.mxu0 0.0
          %1621 = vmatpush1.msra.mxu0 %v1596
          %1622 = vmatprep.subr.mxu0 0.0
          %1623 = vmatpush1.msra.mxu0 %v1597
          %1624 = vmatprep.subr.mxu0 0.0
          %1625 = vmatpush1.msra.mxu0 %v1598
          %1626 = vmatprep.subr.mxu0 0.0
          %1627 = vmatpush1.msra.mxu0 0.0
          %1628 = vmatprep.subr.mxu0 0.0
          %1629 = vmatpush1.msra.mxu0 0.0
          %1630 = vmatprep.subr.mxu0 0.0
          %1631 = vmatpush1.msra.mxu0 0.0
          %1632 = vmatprep.subr.mxu0 0.0
          %1633 = vmatpush1.msra.mxu0 0.0
          %1634 = vmatprep.subr.mxu0 0.0
          %1635 = vmatpush1.msra.mxu0 0.0
          %1636 = vmatprep.subr.mxu0 0.0
          %1637 = vmatpush1.msra.mxu0 0.0
          %1638 = vmatprep.subr.mxu0 0.0
          %1639 = vmatpush1.msra.mxu0 0.0
          %1640 = vmatprep.subr.mxu0 0.0
          %1641 = vmatpush1.msra.mxu0 0.0
          %1642 = vmatprep.subr.mxu0 0.0
          %1643 = vmatpush1.msra.mxu0 0.0
          %1644 = vmatprep.subr.mxu0 0.0
          %1645 = vmatpush1.msra.mxu0 0.0
          %1646 = vmatprep.subr.mxu0 0.0
          %1647 = vmatpush1.msra.mxu0 0.0
          %1648 = vmatprep.subr.mxu0 0.0
          %1649 = vmatpush1.msra.mxu0 0.0
          %1650 = vmatprep.subr.mxu0 0.0
          %1651 = vmatpush1.msra.mxu0 0.0
          %1652 = vmatprep.subr.mxu0 0.0
          %1653 = vmatpush1.msra.mxu0 0.0
          %1654 = vmatprep.subr.mxu0 0.0
          %1655 = vmatpush1.msra.mxu0 0.0
          %1656 = vmatprep.subr.mxu0 0.0
          %1657 = vmatpush1.msra.mxu0 0.0
          %1658 = vmatprep.subr.mxu0 0.0
          %1659 = vmatpush1.msra.mxu0 0.0
          %1660 = vmatprep.subr.mxu0 0.0
          %1661 = vmatpush1.msra.mxu0 0.0
          %1662 = vmatprep.subr.mxu0 0.0
          %1663 = vmatpush1.msra.mxu0 0.0
          %1664 = vmatprep.subr.mxu0 0.0
          %1665 = vmatpush1.msra.mxu0 0.0
          %1666 = vmatprep.subr.mxu0 0.0
          %1667 = vmatpush1.msra.mxu0 0.0
          %1668 = vmatprep.subr.mxu0 0.0
          %1669 = vmatpush1.msra.mxu0 0.0
          %1670 = vmatprep.subr.mxu0 0.0
          %1671 = vmatpush1.msra.mxu0 0.0
          %1672 = vmatprep.subr.mxu0 0.0
          %1673 = vmatpush1.msra.mxu0 0.0
          %1674 = vmatprep.mubr.f32.mxu0 0.0
          %1675 = vmatmul.mubr.f32.gmra.mrb[0].mxu0 %v1608
          %v1676 = vpop.f32.mrb[0].mxu0
          %v1677 = vadd.f32 %v1604, %v1676
          %v1678 = vpop.f32.mrb[0].mxu0
          %1679 = vdwg.mxu0
          %v1680 = vmax.f32 %v1677, 0.0
          %v1681 = vld [vmem:[%s7] sm:$0xff]
          %v1682 = vld [vmem:[%s7 + $0x8] sm:$0xff]
          %v1683 = vld [vmem:[%s7 + $0x10] sm:$0xff]
          %v1684 = vld [vmem:[%s7 + $0x18] sm:$0xff]
          %v1685 = vld [vmem:[#allocation11] sm:$0x1]
          %v1687 = vlaneseq
          %v1688 = vshrl.u32 %v1687, 7
          %v1689 = vsub.s32 0, %v1688
          %v1690 = vrot.slane %v1685, %v1689
          %vm1692 = vcmask 261120
          %v1694 = vsel %vm1692, %v1680, 0
          %1696 = vmatprep.subr.mxu0 0.0
          %1697 = vmatpush1.msra.mxu0 %v1681
          %1698 = vmatprep.subr.mxu0 0.0
          %1699 = vmatpush1.msra.mxu0 %v1682
          %1700 = vmatprep.subr.mxu0 0.0
          %1701 = vmatpush1.msra.mxu0 %v1683
          %1702 = vmatprep.subr.mxu0 0.0
          %1703 = vmatpush1.msra.mxu0 %v1684
          %1704 = vmatprep.subr.mxu0 0.0
          %1705 = vmatpush1.msra.mxu0 0.0
          %1706 = vmatprep.subr.mxu0 0.0
          %1707 = vmatpush1.msra.mxu0 0.0
          %1708 = vmatprep.subr.mxu0 0.0
          %1709 = vmatpush1.msra.mxu0 0.0
          %1710 = vmatprep.subr.mxu0 0.0
          %1711 = vmatpush1.msra.mxu0 0.0
          %1712 = vmatprep.subr.mxu0 0.0
          %1713 = vmatpush1.msra.mxu0 0.0
          %1714 = vmatprep.subr.mxu0 0.0
          %1715 = vmatpush1.msra.mxu0 0.0
          %1716 = vmatprep.subr.mxu0 0.0
          %1717 = vmatpush1.msra.mxu0 0.0
          %1718 = vmatprep.subr.mxu0 0.0
          %1719 = vmatpush1.msra.mxu0 0.0
          %1720 = vmatprep.subr.mxu0 0.0
          %1721 = vmatpush1.msra.mxu0 0.0
          %1722 = vmatprep.subr.mxu0 0.0
          %1723 = vmatpush1.msra.mxu0 0.0
          %1724 = vmatprep.subr.mxu0 0.0
          %1725 = vmatpush1.msra.mxu0 0.0
          %1726 = vmatprep.subr.mxu0 0.0
          %1727 = vmatpush1.msra.mxu0 0.0
          %1728 = vmatprep.subr.mxu0 0.0
          %1729 = vmatpush1.msra.mxu0 0.0
          %1730 = vmatprep.subr.mxu0 0.0
          %1731 = vmatpush1.msra.mxu0 0.0
          %1732 = vmatprep.subr.mxu0 0.0
          %1733 = vmatpush1.msra.mxu0 0.0
          %1734 = vmatprep.subr.mxu0 0.0
          %1735 = vmatpush1.msra.mxu0 0.0
          %1736 = vmatprep.subr.mxu0 0.0
          %1737 = vmatpush1.msra.mxu0 0.0
          %1738 = vmatprep.subr.mxu0 0.0
          %1739 = vmatpush1.msra.mxu0 0.0
          %1740 = vmatprep.subr.mxu0 0.0
          %1741 = vmatpush1.msra.mxu0 0.0
          %1742 = vmatprep.subr.mxu0 0.0
          %1743 = vmatpush1.msra.mxu0 0.0
          %1744 = vmatprep.subr.mxu0 0.0
          %1745 = vmatpush1.msra.mxu0 0.0
          %1746 = vmatprep.subr.mxu0 0.0
          %1747 = vmatpush1.msra.mxu0 0.0
          %1748 = vmatprep.subr.mxu0 0.0
          %1749 = vmatpush1.msra.mxu0 0.0
          %1750 = vmatprep.subr.mxu0 0.0
          %1751 = vmatpush1.msra.mxu0 0.0
          %1752 = vmatprep.subr.mxu0 0.0
          %1753 = vmatpush1.msra.mxu0 0.0
          %1754 = vmatprep.subr.mxu0 0.0
          %1755 = vmatpush1.msra.mxu0 0.0
          %1756 = vmatprep.subr.mxu0 0.0
          %1757 = vmatpush1.msra.mxu0 0.0
          %1758 = vmatprep.subr.mxu0 0.0
          %1759 = vmatpush1.msra.mxu0 0.0
          %1760 = vmatprep.mubr.f32.mxu0 0.0
          %1761 = vmatmul.mubr.f32.gmra.mrb[0].mxu0 %v1694
          %v1762 = vpop.f32.mrb[0].mxu0
          %v1763 = vadd.f32 %v1690, %v1762
          %v1764 = vpop.f32.mrb[0].mxu0
          %1765 = vdwg.mxu0
          %v1766 = vmul.f32 %v1763, %v1763
          %vm1767 = vcmask 31744
          %v1768 = vsel %vm1767, %v1766, 0.0
          %1769 = vadd.xlane.f32.xlu0 %v1768
          %v1770 = vpop.xlane.xlu0 %1769
          %v1771 = vrsqrt.pop %v1770
          %v1772 = vlaneseq
          %v1773 = vand.u32 %v1772, 127
          %vm1774 = vcmp.lt.s32.totalorder %v1773, 4
          %v1775 = vmul.f32 %v1763, %v1771
          %v1776 = vsel %vm1774, %v1775, %v1763
          %vm1777 = vcmask 64512
          %1778 = vst.msk [vmem:[%s450] sm:$0xff] %vm1777, %v1776
        $region88: #{tpu_custom_call.1} parent=55 // pred_fallthru
          _
        %p1779 = scmp.lt.s32.totalorder %s30, 1
        %s1780 = scalar_select %p1779, %s30, 1
        %s1781 = smul.addr %s1780, 8
        %s1782 = scalar_lea.vmem %s9, %s1781
        // Predicated region
        $region89: #{tpu_custom_call.1} parent=55 // pred_check
          %p1783 = pneg %p252
        $region90: #{tpu_custom_call.1} parent=55 // pred_check_branch
          %1785 = sbr.rel (%p1783) target = $region92
        $region91: #{tpu_custom_call.1} parent=55 // pred_region
          _
        $region92: #{tpu_custom_call.1} parent=55 // pred_fallthru
          _
      $region56: #{tpu_custom_call.1} parent=5 // pred_fallthru
        _
      %p1786 = scmp.le.s32.totalorder 2, %s21
      // Predicated region
      $region93: #{tpu_custom_call.1} parent=5 // pred_check
        %p1787 = pneg %p1786
      $region94: #{tpu_custom_call.1} parent=5 // pred_check_branch
        %1789 = sbr.rel (%p1787) target = $region96
      $region95: #{tpu_custom_call.1} parent=5 // pred_region
        %s1790 = ssub.s32 %s21, 2
        // Predicated region
        $region97: #{tpu_custom_call.1} parent=95 // pred_check
          %p1791 = pneg %p258
        $region98: #{tpu_custom_call.1} parent=95 // pred_check_branch
          %1793 = sbr.rel (%p1791) target = $region100
        $region99: #{tpu_custom_call.1} parent=95 // pred_region
          %p1794 = scmp.lt.s32.totalorder %s32, 1
          %s1795 = scalar_select %p1794, %s32, 1
          %s1796 = smul.addr %s1795, 8
          %s1797 = scalar_lea.vmem %s9, %s1796
        $region100: #{tpu_custom_call.1} parent=95 // pred_fallthru
          _
      $region96: #{tpu_custom_call.1} parent=5 // pred_fallthru
        _
    $region6: #{tpu_custom_call.1} parent=1 // loop_footer
      %s25 = sadd.s32 1, %s21
    $region7: #{tpu_custom_call.1} parent=1 // loop_footer_branch
      %20 = sbr.rel target = $region3
    $region8: #{tpu_custom_call.1} parent=1 // loop_exit
      _
    %1798 = vsyncpa [#allocation4], 1
    %s1799 = scalar_lea.sflag [#allocation4], 1
    %1800 = vsyncpa %s1799, 1
    %1801 = vsyncpa [#allocation6], 1
    %1802 = vsyncpa [#allocation9], 1
    %1803 = vsyncpa [#allocation12], 1

</llo_original>
